<compile_context>
chip_gen: v6e
topology: v6e:2x2x1
jax: 0.10.0
libtpu: 0.0.40
codegen_flags: <defaults>
</compile_context>

<pallas_src>
import functools

import jax
import jax.numpy as jnp
from jax.experimental import pallas as pl
from jax.experimental.pallas import tpu as pltpu

EPS = 1e-5  # nn.BatchNorm2d default eps


def block_kernel(x_ref, hrow_ref, wrow_ref, anc_ref,
                 w1_ref, b1_ref, g1_ref, be1_ref,
                 w2_ref, b2_ref, g2_ref, be2_ref,
                 out_ref, p1_ref, p2_ref,
                 *, N, H, W, Cin, Cout):
    HW = H * W
    NHW = N * HW
    Npool = N * (H // 2) * (W // 2)

    # Per-pixel (h, w) coordinates along the flat NHW lane axis (precomputed
    # wrapper-side; tiny i32 rows, avoids in-kernel vector div/mod).
    h_idx = hrow_ref[...]                                     # (1, NHW) i32
    w_idx = wrow_ref[...]                                     # (1, NHW) i32

    # The 9 tap boundary masks (shared by both convs) — computed once.
    def tap_mask(dy, dx):
        hh = h_idx + (dy - 1)
        ww = w_idx + (dx - 1)
        return jnp.logical_and(jnp.logical_and(hh >= 0, hh < H),
                               jnp.logical_and(ww >= 0, ww < W))

    masks = [tap_mask(dy, dx) for dy in range(3) for dx in range(3)]

    def shift_lanes(v, s):
        # result[:, j] = v[:, (j + s) % NHW]; wrapped positions are masked (or
        # never read) by the caller.  XLU lane rotate — off the VPU/store path.
        sh = (-s) % NHW
        return v if sh == 0 else pltpu.roll(v, shift=sh, axis=1)

    def im2col(dst_ref, src, C):
        # Patch matrix (9*C, NHW): row block k*C..(k+1)*C holds tap k = dy*3+dx.
        # Each tap is one roll + one select + one full-lane-width (C, NHW)
        # store — no padded staging buffer, no window-slice relayouts.
        for dy in range(3):
            for dx in range(3):
                k = dy * 3 + dx
                s = (dy - 1) * W + (dx - 1)
                dst_ref[k * C:(k + 1) * C, :] = jnp.where(
                    masks[k], shift_lanes(src, s), 0.0)
        return dst_ref[...]                                   # (9*C, NHW) f32

    def conv_relu_bn(patches, w_ref, b_ref, g_ref, be_ref):
        # Single MXU matmul in the transposed layout: (Cout, 9C) x (9C, NHW).
        acc = jnp.dot(w_ref[...], patches,
                      preferred_element_type=jnp.float32)     # (Cout, NHW)
        r = jnp.maximum(acc + b_ref[...], 0.0)                # bias once, ReLU
        # BatchNorm2d (training-mode batch stats): lane-axis reductions.
        mean = jnp.mean(r, axis=1, keepdims=True)             # (Cout, 1)
        d = r - mean
        var = jnp.mean(d * d, axis=1, keepdims=True)          # biased variance
        scale = g_ref[...] * jax.lax.rsqrt(var + EPS)
        return d * scale + be_ref[...]                        # (Cout, NHW) f32

    # ---- conv1 -> ReLU -> BN1 (padding handled by roll+mask taps) -----------
    z1 = conv_relu_bn(im2col(p1_ref, x_ref[...], Cin),
                      w1_ref, b1_ref, g1_ref, be1_ref)
    # ---- conv2 -> ReLU -> BN2 ------------------------------------------------
    z2 = conv_relu_bn(im2col(p2_ref, z1, Cout),
                      w2_ref, b2_ref, g2_ref, be2_ref)

    # ---- MaxPool2d(2, 2) ------------------------------------------------------
    # 2x2-window max anchored at every pixel: two lane rolls + two vmax.
    mw = jnp.maximum(z2, shift_lanes(z2, 1))                  # w-pair max
    m4 = jnp.maximum(mw, shift_lanes(mw, W))                  # + h-pair max
    # Downsample to (even h, even w) anchors with a one-hot gather on the idle
    # MXU: out[:, j'] = m4[:, anchor(j')].  Wrapped roll positions are never
    # anchors, so they are never selected.
    row_ids = jax.lax.broadcasted_iota(jnp.int32, (NHW, Npool), 0)
    sel = jnp.where(row_ids == anc_ref[...], 1.0, 0.0).astype(jnp.float32)
    pooled = jnp.dot(m4, sel, preferred_element_type=jnp.float32)
    out_ref[...] = pooled.astype(out_ref.dtype)               # (Cout, Npool)


@jax.jit
def block_forward(x_nchw, params):
    """PyTorch-equivalent forward. x_nchw: (N, Cin, H, W) f32 -> (N, Cout, H/2, W/2)."""
    w1, b1, g1, be1, w2, b2, g2, be2 = params
    N, Cin, H, W = x_nchw.shape
    Cout = w1.shape[0]
    assert H % 2 == 0 and W % 2 == 0, "MaxPool2d(2,2) expects even H, W"
    Hh, Wh = H // 2, W // 2
    NHW = N * H * W
    Npool = N * Hh * Wh

    # Channels-on-sublanes / pixels-on-lanes layout for the kernel (the only
    # wrapper-side activation pass; no jnp.pad — padding is roll+mask in-kernel).
    x_t = jnp.transpose(x_nchw, (1, 0, 2, 3)).reshape(Cin, NHW)

    # Conv weights (Cout, Cin, 3, 3) -> (Cout, 9*Cin), columns ordered
    # (ky, kx, ci) to match the im2col patch-row layout.
    w1k = jnp.transpose(w1, (0, 2, 3, 1)).reshape(Cout, 9 * Cin).astype(jnp.float32)
    w2k = jnp.transpose(w2, (0, 2, 3, 1)).reshape(Cout, 9 * Cout).astype(jnp.float32)
    col = lambda v: v.reshape(-1, 1).astype(jnp.float32)      # per-channel columns

    # Tiny shape-derived index rows (constant-folded by XLA): pixel (h, w)
    # coordinates and the maxpool anchor map used by the in-kernel one-hot.
    pix = jnp.arange(NHW, dtype=jnp.int32)
    hrow = ((pix % (H * W)) // W).reshape(1, NHW)
    wrow = (pix % W).reshape(1, NHW)
    pidx = jnp.arange(Npool, dtype=jnp.int32)
    anc = ((pidx // (Hh * Wh)) * (H * W)
           + ((pidx % (Hh * Wh)) // Wh) * (2 * W)
           + (pidx % Wh) * 2).reshape(1, Npool)

    vmem = pl.BlockSpec(memory_space=pltpu.MemorySpace.VMEM)
    kernel = functools.partial(block_kernel, N=N, H=H, W=W, Cin=Cin, Cout=Cout)
    out = pl.pallas_call(
        kernel,
        out_shape=jax.ShapeDtypeStruct((Cout, Npool), jnp.float32),
        in_specs=[vmem] * 12,
        out_specs=vmem,
        scratch_shapes=[
            pltpu.VMEM((9 * Cin, NHW), jnp.float32),          # conv1 patch matrix
            pltpu.VMEM((9 * Cout, NHW), jnp.float32),         # conv2 patch matrix
        ],
    )(x_t, hrow, wrow, anc,
      w1k, col(b1), col(g1), col(be1),
      w2k, col(b2), col(g2), col(be2))

    out = out.reshape(Cout, N, Hh, Wh)                        # lane-dense slab -> NCHW
    return jnp.transpose(out, (1, 0, 2, 3))


def block_reference(x_nchw, params):
    """Pure-JAX f32 reference (training-mode BatchNorm), used only for verification."""
    w1, b1, g1, be1, w2, b2, g2, be2 = params
    x = jnp.transpose(x_nchw, (0, 2, 3, 1))

    def conv(x, w, b):
        wh = jnp.transpose(w, (2, 3, 1, 0))  # HWIO
        y = jax.lax.conv_general_dilated(
            x, wh, (1, 1), ((1, 1), (1, 1)),
            dimension_numbers=('NHWC', 'HWIO', 'NHWC'))
        return y + b

    def bn(y, g, be):
        m = jnp.mean(y, axis=(0, 1, 2), keepdims=True)
        v = jnp.mean((y - m) ** 2, axis=(0, 1, 2), keepdims=True)
        return (y - m) * jax.lax.rsqrt(v + EPS) * g + be

    y = bn(jax.nn.relu(conv(x, w1, b1)), g1, be1)
    y = bn(jax.nn.relu(conv(y, w2, b2)), g2, be2)
    N, H, W, C = y.shape
    y = y.reshape(N, H // 2, 2, W // 2, 2, C).max(axis=(2, 4))
    return jnp.transpose(y, (0, 3, 1, 2))


if __name__ == "__main__":
    N, Cin, Cout, H, W = 2, 4, 8, 16, 16

    key = jax.random.PRNGKey(0)
    k_x, k_w1, k_b1, k_w2, k_b2 = jax.random.split(key, 5)
    x = jax.random.normal(k_x, (N, Cin, H, W), jnp.float32)
    # Conv parameters (deterministic random); BatchNorm affine uses the
    # PyTorch default init (gamma=1, beta=0).
    w1 = jax.random.normal(k_w1, (Cout, Cin, 3, 3), jnp.float32) * 0.2
    b1 = jax.random.normal(k_b1, (Cout,), jnp.float32) * 0.1
    w2 = jax.random.normal(k_w2, (Cout, Cout, 3, 3), jnp.float32) * 0.2
    b2 = jax.random.normal(k_b2, (Cout,), jnp.float32) * 0.1
    g1 = jnp.ones((Cout,), jnp.float32)
    be1 = jnp.zeros((Cout,), jnp.float32)
    g2 = jnp.ones((Cout,), jnp.float32)
    be2 = jnp.zeros((Cout,), jnp.float32)
    params = (w1, b1, g1, be1, w2, b2, g2, be2)

    out = jax.block_until_ready(block_forward(x, params))
    ref = jax.block_until_ready(block_reference(x, params))

    assert out.shape == (N, Cout, H // 2, W // 2), out.shape
    # f32 MXU inputs -> tolerance tightened vs the previous bf16 version.
    max_err = float(jnp.max(jnp.abs(out - ref)))
    assert jnp.allclose(out, ref, rtol=1e-3, atol=1e-3), f"max_err={max_err}"
    print("KERNEL_OK")
</pallas_src>

<mosaic_0001>
module attributes {stable_mosaic.version = 11 : i64} {
  func.func @block_kernel(%arg0: memref<4x512xf32, #tpu.memory_space<vmem>>, %arg1: memref<1x512xi32, #tpu.memory_space<vmem>>, %arg2: memref<1x512xi32, #tpu.memory_space<vmem>>, %arg3: memref<1x128xi32, #tpu.memory_space<vmem>>, %arg4: memref<8x36xf32, #tpu.memory_space<vmem>>, %arg5: memref<8x1xf32, #tpu.memory_space<vmem>>, %arg6: memref<8x1xf32, #tpu.memory_space<vmem>>, %arg7: memref<8x1xf32, #tpu.memory_space<vmem>>, %arg8: memref<8x72xf32, #tpu.memory_space<vmem>>, %arg9: memref<8x1xf32, #tpu.memory_space<vmem>>, %arg10: memref<8x1xf32, #tpu.memory_space<vmem>>, %arg11: memref<8x1xf32, #tpu.memory_space<vmem>>, %arg12: memref<8x128xf32, #tpu.memory_space<vmem>>, %arg13: memref<36x512xf32, #tpu.memory_space<vmem>>, %arg14: memref<72x512xf32, #tpu.memory_space<vmem>>) attributes {dimension_semantics = [], scalar_prefetch = 0 : i64, scratch_operands = 2 : i64, tpu.core_type = #tpu.core_type<tc>} {
    %c0 = arith.constant 0 : index
    %c0_0 = arith.constant 0 : index
    %0 = vector.load %arg1[%c0, %c0_0] : memref<1x512xi32, #tpu.memory_space<vmem>>, vector<1x512xi32>
    %c0_1 = arith.constant 0 : index
    %c0_2 = arith.constant 0 : index
    %1 = vector.load %arg2[%c0_1, %c0_2] : memref<1x512xi32, #tpu.memory_space<vmem>>, vector<1x512xi32>
    %c-1_i32 = arith.constant -1 : i32
    %2 = vector.broadcast %c-1_i32 : i32 to vector<1x512xi32>
    %3 = arith.addi %0, %2 : vector<1x512xi32>
    %c-1_i32_3 = arith.constant -1 : i32
    %4 = vector.broadcast %c-1_i32_3 : i32 to vector<1x512xi32>
    %5 = arith.addi %1, %4 : vector<1x512xi32>
    %c0_i32 = arith.constant 0 : i32
    %6 = vector.broadcast %c0_i32 : i32 to vector<1x512xi32>
    %7 = arith.cmpi sge, %3, %6 : vector<1x512xi32>
    %c16_i32 = arith.constant 16 : i32
    %8 = vector.broadcast %c16_i32 : i32 to vector<1x512xi32>
    %9 = arith.cmpi slt, %3, %8 : vector<1x512xi32>
    %10 = arith.andi %7, %9 : vector<1x512xi1>
    %c0_i32_4 = arith.constant 0 : i32
    %11 = vector.broadcast %c0_i32_4 : i32 to vector<1x512xi32>
    %12 = arith.cmpi sge, %5, %11 : vector<1x512xi32>
    %c16_i32_5 = arith.constant 16 : i32
    %13 = vector.broadcast %c16_i32_5 : i32 to vector<1x512xi32>
    %14 = arith.cmpi slt, %5, %13 : vector<1x512xi32>
    %15 = arith.andi %12, %14 : vector<1x512xi1>
    %16 = arith.andi %10, %15 : vector<1x512xi1>
    %c-1_i32_6 = arith.constant -1 : i32
    %17 = vector.broadcast %c-1_i32_6 : i32 to vector<1x512xi32>
    %18 = arith.addi %0, %17 : vector<1x512xi32>
    %c0_i32_7 = arith.constant 0 : i32
    %19 = vector.broadcast %c0_i32_7 : i32 to vector<1x512xi32>
    %20 = arith.addi %1, %19 : vector<1x512xi32>
    %c0_i32_8 = arith.constant 0 : i32
    %21 = vector.broadcast %c0_i32_8 : i32 to vector<1x512xi32>
    %22 = arith.cmpi sge, %18, %21 : vector<1x512xi32>
    %c16_i32_9 = arith.constant 16 : i32
    %23 = vector.broadcast %c16_i32_9 : i32 to vector<1x512xi32>
    %24 = arith.cmpi slt, %18, %23 : vector<1x512xi32>
    %25 = arith.andi %22, %24 : vector<1x512xi1>
    %c0_i32_10 = arith.constant 0 : i32
    %26 = vector.broadcast %c0_i32_10 : i32 to vector<1x512xi32>
    %27 = arith.cmpi sge, %20, %26 : vector<1x512xi32>
    %c16_i32_11 = arith.constant 16 : i32
    %28 = vector.broadcast %c16_i32_11 : i32 to vector<1x512xi32>
    %29 = arith.cmpi slt, %20, %28 : vector<1x512xi32>
    %30 = arith.andi %27, %29 : vector<1x512xi1>
    %31 = arith.andi %25, %30 : vector<1x512xi1>
    %c-1_i32_12 = arith.constant -1 : i32
    %32 = vector.broadcast %c-1_i32_12 : i32 to vector<1x512xi32>
    %33 = arith.addi %0, %32 : vector<1x512xi32>
    %c1_i32 = arith.constant 1 : i32
    %34 = vector.broadcast %c1_i32 : i32 to vector<1x512xi32>
    %35 = arith.addi %1, %34 : vector<1x512xi32>
    %c0_i32_13 = arith.constant 0 : i32
    %36 = vector.broadcast %c0_i32_13 : i32 to vector<1x512xi32>
    %37 = arith.cmpi sge, %33, %36 : vector<1x512xi32>
    %c16_i32_14 = arith.constant 16 : i32
    %38 = vector.broadcast %c16_i32_14 : i32 to vector<1x512xi32>
    %39 = arith.cmpi slt, %33, %38 : vector<1x512xi32>
    %40 = arith.andi %37, %39 : vector<1x512xi1>
    %c0_i32_15 = arith.constant 0 : i32
    %41 = vector.broadcast %c0_i32_15 : i32 to vector<1x512xi32>
    %42 = arith.cmpi sge, %35, %41 : vector<1x512xi32>
    %c16_i32_16 = arith.constant 16 : i32
    %43 = vector.broadcast %c16_i32_16 : i32 to vector<1x512xi32>
    %44 = arith.cmpi slt, %35, %43 : vector<1x512xi32>
    %45 = arith.andi %42, %44 : vector<1x512xi1>
    %46 = arith.andi %40, %45 : vector<1x512xi1>
    %c0_i32_17 = arith.constant 0 : i32
    %47 = vector.broadcast %c0_i32_17 : i32 to vector<1x512xi32>
    %48 = arith.addi %0, %47 : vector<1x512xi32>
    %c-1_i32_18 = arith.constant -1 : i32
    %49 = vector.broadcast %c-1_i32_18 : i32 to vector<1x512xi32>
    %50 = arith.addi %1, %49 : vector<1x512xi32>
    %c0_i32_19 = arith.constant 0 : i32
    %51 = vector.broadcast %c0_i32_19 : i32 to vector<1x512xi32>
    %52 = arith.cmpi sge, %48, %51 : vector<1x512xi32>
    %c16_i32_20 = arith.constant 16 : i32
    %53 = vector.broadcast %c16_i32_20 : i32 to vector<1x512xi32>
    %54 = arith.cmpi slt, %48, %53 : vector<1x512xi32>
    %55 = arith.andi %52, %54 : vector<1x512xi1>
    %c0_i32_21 = arith.constant 0 : i32
    %56 = vector.broadcast %c0_i32_21 : i32 to vector<1x512xi32>
    %57 = arith.cmpi sge, %50, %56 : vector<1x512xi32>
    %c16_i32_22 = arith.constant 16 : i32
    %58 = vector.broadcast %c16_i32_22 : i32 to vector<1x512xi32>
    %59 = arith.cmpi slt, %50, %58 : vector<1x512xi32>
    %60 = arith.andi %57, %59 : vector<1x512xi1>
    %61 = arith.andi %55, %60 : vector<1x512xi1>
    %c0_i32_23 = arith.constant 0 : i32
    %62 = vector.broadcast %c0_i32_23 : i32 to vector<1x512xi32>
    %63 = arith.addi %0, %62 : vector<1x512xi32>
    %c0_i32_24 = arith.constant 0 : i32
    %64 = vector.broadcast %c0_i32_24 : i32 to vector<1x512xi32>
    %65 = arith.addi %1, %64 : vector<1x512xi32>
    %c0_i32_25 = arith.constant 0 : i32
    %66 = vector.broadcast %c0_i32_25 : i32 to vector<1x512xi32>
    %67 = arith.cmpi sge, %63, %66 : vector<1x512xi32>
    %c16_i32_26 = arith.constant 16 : i32
    %68 = vector.broadcast %c16_i32_26 : i32 to vector<1x512xi32>
    %69 = arith.cmpi slt, %63, %68 : vector<1x512xi32>
    %70 = arith.andi %67, %69 : vector<1x512xi1>
    %c0_i32_27 = arith.constant 0 : i32
    %71 = vector.broadcast %c0_i32_27 : i32 to vector<1x512xi32>
    %72 = arith.cmpi sge, %65, %71 : vector<1x512xi32>
    %c16_i32_28 = arith.constant 16 : i32
    %73 = vector.broadcast %c16_i32_28 : i32 to vector<1x512xi32>
    %74 = arith.cmpi slt, %65, %73 : vector<1x512xi32>
    %75 = arith.andi %72, %74 : vector<1x512xi1>
    %76 = arith.andi %70, %75 : vector<1x512xi1>
    %c0_i32_29 = arith.constant 0 : i32
    %77 = vector.broadcast %c0_i32_29 : i32 to vector<1x512xi32>
    %78 = arith.addi %0, %77 : vector<1x512xi32>
    %c1_i32_30 = arith.constant 1 : i32
    %79 = vector.broadcast %c1_i32_30 : i32 to vector<1x512xi32>
    %80 = arith.addi %1, %79 : vector<1x512xi32>
    %c0_i32_31 = arith.constant 0 : i32
    %81 = vector.broadcast %c0_i32_31 : i32 to vector<1x512xi32>
    %82 = arith.cmpi sge, %78, %81 : vector<1x512xi32>
    %c16_i32_32 = arith.constant 16 : i32
    %83 = vector.broadcast %c16_i32_32 : i32 to vector<1x512xi32>
    %84 = arith.cmpi slt, %78, %83 : vector<1x512xi32>
    %85 = arith.andi %82, %84 : vector<1x512xi1>
    %c0_i32_33 = arith.constant 0 : i32
    %86 = vector.broadcast %c0_i32_33 : i32 to vector<1x512xi32>
    %87 = arith.cmpi sge, %80, %86 : vector<1x512xi32>
    %c16_i32_34 = arith.constant 16 : i32
    %88 = vector.broadcast %c16_i32_34 : i32 to vector<1x512xi32>
    %89 = arith.cmpi slt, %80, %88 : vector<1x512xi32>
    %90 = arith.andi %87, %89 : vector<1x512xi1>
    %91 = arith.andi %85, %90 : vector<1x512xi1>
    %c1_i32_35 = arith.constant 1 : i32
    %92 = vector.broadcast %c1_i32_35 : i32 to vector<1x512xi32>
    %93 = arith.addi %0, %92 : vector<1x512xi32>
    %c-1_i32_36 = arith.constant -1 : i32
    %94 = vector.broadcast %c-1_i32_36 : i32 to vector<1x512xi32>
    %95 = arith.addi %1, %94 : vector<1x512xi32>
    %c0_i32_37 = arith.constant 0 : i32
    %96 = vector.broadcast %c0_i32_37 : i32 to vector<1x512xi32>
    %97 = arith.cmpi sge, %93, %96 : vector<1x512xi32>
    %c16_i32_38 = arith.constant 16 : i32
    %98 = vector.broadcast %c16_i32_38 : i32 to vector<1x512xi32>
    %99 = arith.cmpi slt, %93, %98 : vector<1x512xi32>
    %100 = arith.andi %97, %99 : vector<1x512xi1>
    %c0_i32_39 = arith.constant 0 : i32
    %101 = vector.broadcast %c0_i32_39 : i32 to vector<1x512xi32>
    %102 = arith.cmpi sge, %95, %101 : vector<1x512xi32>
    %c16_i32_40 = arith.constant 16 : i32
    %103 = vector.broadcast %c16_i32_40 : i32 to vector<1x512xi32>
    %104 = arith.cmpi slt, %95, %103 : vector<1x512xi32>
    %105 = arith.andi %102, %104 : vector<1x512xi1>
    %106 = arith.andi %100, %105 : vector<1x512xi1>
    %c1_i32_41 = arith.constant 1 : i32
    %107 = vector.broadcast %c1_i32_41 : i32 to vector<1x512xi32>
    %108 = arith.addi %0, %107 : vector<1x512xi32>
    %c0_i32_42 = arith.constant 0 : i32
    %109 = vector.broadcast %c0_i32_42 : i32 to vector<1x512xi32>
    %110 = arith.addi %1, %109 : vector<1x512xi32>
    %c0_i32_43 = arith.constant 0 : i32
    %111 = vector.broadcast %c0_i32_43 : i32 to vector<1x512xi32>
    %112 = arith.cmpi sge, %108, %111 : vector<1x512xi32>
    %c16_i32_44 = arith.constant 16 : i32
    %113 = vector.broadcast %c16_i32_44 : i32 to vector<1x512xi32>
    %114 = arith.cmpi slt, %108, %113 : vector<1x512xi32>
    %115 = arith.andi %112, %114 : vector<1x512xi1>
    %c0_i32_45 = arith.constant 0 : i32
    %116 = vector.broadcast %c0_i32_45 : i32 to vector<1x512xi32>
    %117 = arith.cmpi sge, %110, %116 : vector<1x512xi32>
    %c16_i32_46 = arith.constant 16 : i32
    %118 = vector.broadcast %c16_i32_46 : i32 to vector<1x512xi32>
    %119 = arith.cmpi slt, %110, %118 : vector<1x512xi32>
    %120 = arith.andi %117, %119 : vector<1x512xi1>
    %121 = arith.andi %115, %120 : vector<1x512xi1>
    %c1_i32_47 = arith.constant 1 : i32
    %122 = vector.broadcast %c1_i32_47 : i32 to vector<1x512xi32>
    %123 = arith.addi %0, %122 : vector<1x512xi32>
    %c1_i32_48 = arith.constant 1 : i32
    %124 = vector.broadcast %c1_i32_48 : i32 to vector<1x512xi32>
    %125 = arith.addi %1, %124 : vector<1x512xi32>
    %c0_i32_49 = arith.constant 0 : i32
    %126 = vector.broadcast %c0_i32_49 : i32 to vector<1x512xi32>
    %127 = arith.cmpi sge, %123, %126 : vector<1x512xi32>
    %c16_i32_50 = arith.constant 16 : i32
    %128 = vector.broadcast %c16_i32_50 : i32 to vector<1x512xi32>
    %129 = arith.cmpi slt, %123, %128 : vector<1x512xi32>
    %130 = arith.andi %127, %129 : vector<1x512xi1>
    %c0_i32_51 = arith.constant 0 : i32
    %131 = vector.broadcast %c0_i32_51 : i32 to vector<1x512xi32>
    %132 = arith.cmpi sge, %125, %131 : vector<1x512xi32>
    %c16_i32_52 = arith.constant 16 : i32
    %133 = vector.broadcast %c16_i32_52 : i32 to vector<1x512xi32>
    %134 = arith.cmpi slt, %125, %133 : vector<1x512xi32>
    %135 = arith.andi %132, %134 : vector<1x512xi1>
    %136 = arith.andi %130, %135 : vector<1x512xi1>
    %c0_53 = arith.constant 0 : index
    %c0_54 = arith.constant 0 : index
    %137 = vector.load %arg0[%c0_53, %c0_54] : memref<4x512xf32, #tpu.memory_space<vmem>>, vector<4x512xf32>
    %c17_i32 = arith.constant 17 : i32
    %138 = tpu.dynamic_rotate %137 by %c17_i32 dim 1 : vector<4x512xf32>, i32 -> vector<4x512xf32>
    %cst = arith.constant 0.000000e+00 : f32
    %139 = vector.shape_cast %16 : vector<1x512xi1> to vector<1x512xi1>
    %140 = vector.broadcast %139 : vector<1x512xi1> to vector<4x512xi1>
    %141 = vector.broadcast %cst : f32 to vector<4x512xf32>
    %142 = arith.select %140, %138, %141 : vector<4x512xi1>, vector<4x512xf32>
    %c0_55 = arith.constant 0 : index
    %c0_56 = arith.constant 0 : index
    %143 = vector.load %arg13[%c0_55, %c0_56] : memref<36x512xf32, #tpu.memory_space<vmem>>, vector<4x512xf32>
    tpu.vector_store %arg13[%c0_55, %c0_56], %142 {strides = array<i32>} : memref<36x512xf32, #tpu.memory_space<vmem>>, vector<4x512xf32>,
    %c16_i32_57 = arith.constant 16 : i32
    %144 = tpu.dynamic_rotate %137 by %c16_i32_57 dim 1 : vector<4x512xf32>, i32 -> vector<4x512xf32>
    %cst_58 = arith.constant 0.000000e+00 : f32
    %145 = vector.shape_cast %31 : vector<1x512xi1> to vector<1x512xi1>
    %146 = vector.broadcast %145 : vector<1x512xi1> to vector<4x512xi1>
    %147 = vector.broadcast %cst_58 : f32 to vector<4x512xf32>
    %148 = arith.select %146, %144, %147 : vector<4x512xi1>, vector<4x512xf32>
    %c4 = arith.constant 4 : index
    %c0_59 = arith.constant 0 : index
    %149 = vector.load %arg13[%c4, %c0_59] : memref<36x512xf32, #tpu.memory_space<vmem>>, vector<4x512xf32>
    tpu.vector_store %arg13[%c4, %c0_59], %148 {strides = array<i32>} : memref<36x512xf32, #tpu.memory_space<vmem>>, vector<4x512xf32>,
    %c15_i32 = arith.constant 15 : i32
    %150 = tpu.dynamic_rotate %137 by %c15_i32 dim 1 : vector<4x512xf32>, i32 -> vector<4x512xf32>
    %cst_60 = arith.constant 0.000000e+00 : f32
    %151 = vector.shape_cast %46 : vector<1x512xi1> to vector<1x512xi1>
    %152 = vector.broadcast %151 : vector<1x512xi1> to vector<4x512xi1>
    %153 = vector.broadcast %cst_60 : f32 to vector<4x512xf32>
    %154 = arith.select %152, %150, %153 : vector<4x512xi1>, vector<4x512xf32>
    %c8 = arith.constant 8 : index
    %c0_61 = arith.constant 0 : index
    %155 = vector.load %arg13[%c8, %c0_61] : memref<36x512xf32, #tpu.memory_space<vmem>>, vector<4x512xf32>
    tpu.vector_store %arg13[%c8, %c0_61], %154 {strides = array<i32>} : memref<36x512xf32, #tpu.memory_space<vmem>>, vector<4x512xf32>,
    %c1_i32_62 = arith.constant 1 : i32
    %156 = tpu.dynamic_rotate %137 by %c1_i32_62 dim 1 : vector<4x512xf32>, i32 -> vector<4x512xf32>
    %cst_63 = arith.constant 0.000000e+00 : f32
    %157 = vector.shape_cast %61 : vector<1x512xi1> to vector<1x512xi1>
    %158 = vector.broadcast %157 : vector<1x512xi1> to vector<4x512xi1>
    %159 = vector.broadcast %cst_63 : f32 to vector<4x512xf32>
    %160 = arith.select %158, %156, %159 : vector<4x512xi1>, vector<4x512xf32>
    %c12 = arith.constant 12 : index
    %c0_64 = arith.constant 0 : index
    %161 = vector.load %arg13[%c12, %c0_64] : memref<36x512xf32, #tpu.memory_space<vmem>>, vector<4x512xf32>
    tpu.vector_store %arg13[%c12, %c0_64], %160 {strides = array<i32>} : memref<36x512xf32, #tpu.memory_space<vmem>>, vector<4x512xf32>,
    %cst_65 = arith.constant 0.000000e+00 : f32
    %162 = vector.shape_cast %76 : vector<1x512xi1> to vector<1x512xi1>
    %163 = vector.broadcast %162 : vector<1x512xi1> to vector<4x512xi1>
    %164 = vector.broadcast %cst_65 : f32 to vector<4x512xf32>
    %165 = arith.select %163, %137, %164 : vector<4x512xi1>, vector<4x512xf32>
    %c16 = arith.constant 16 : index
    %c0_66 = arith.constant 0 : index
    %166 = vector.load %arg13[%c16, %c0_66] : memref<36x512xf32, #tpu.memory_space<vmem>>, vector<4x512xf32>
    tpu.vector_store %arg13[%c16, %c0_66], %165 {strides = array<i32>} : memref<36x512xf32, #tpu.memory_space<vmem>>, vector<4x512xf32>,
    %c511_i32 = arith.constant 511 : i32
    %167 = tpu.dynamic_rotate %137 by %c511_i32 dim 1 : vector<4x512xf32>, i32 -> vector<4x512xf32>
    %cst_67 = arith.constant 0.000000e+00 : f32
    %168 = vector.shape_cast %91 : vector<1x512xi1> to vector<1x512xi1>
    %169 = vector.broadcast %168 : vector<1x512xi1> to vector<4x512xi1>
    %170 = vector.broadcast %cst_67 : f32 to vector<4x512xf32>
    %171 = arith.select %169, %167, %170 : vector<4x512xi1>, vector<4x512xf32>
    %c20 = arith.constant 20 : index
    %c0_68 = arith.constant 0 : index
    %172 = vector.load %arg13[%c20, %c0_68] : memref<36x512xf32, #tpu.memory_space<vmem>>, vector<4x512xf32>
    tpu.vector_store %arg13[%c20, %c0_68], %171 {strides = array<i32>} : memref<36x512xf32, #tpu.memory_space<vmem>>, vector<4x512xf32>,
    %c497_i32 = arith.constant 497 : i32
    %173 = tpu.dynamic_rotate %137 by %c497_i32 dim 1 : vector<4x512xf32>, i32 -> vector<4x512xf32>
    %cst_69 = arith.constant 0.000000e+00 : f32
    %174 = vector.shape_cast %106 : vector<1x512xi1> to vector<1x512xi1>
    %175 = vector.broadcast %174 : vector<1x512xi1> to vector<4x512xi1>
    %176 = vector.broadcast %cst_69 : f32 to vector<4x512xf32>
    %177 = arith.select %175, %173, %176 : vector<4x512xi1>, vector<4x512xf32>
    %c24 = arith.constant 24 : index
    %c0_70 = arith.constant 0 : index
    %178 = vector.load %arg13[%c24, %c0_70] : memref<36x512xf32, #tpu.memory_space<vmem>>, vector<4x512xf32>
    tpu.vector_store %arg13[%c24, %c0_70], %177 {strides = array<i32>} : memref<36x512xf32, #tpu.memory_space<vmem>>, vector<4x512xf32>,
    %c496_i32 = arith.constant 496 : i32
    %179 = tpu.dynamic_rotate %137 by %c496_i32 dim 1 : vector<4x512xf32>, i32 -> vector<4x512xf32>
    %cst_71 = arith.constant 0.000000e+00 : f32
    %180 = vector.shape_cast %121 : vector<1x512xi1> to vector<1x512xi1>
    %181 = vector.broadcast %180 : vector<1x512xi1> to vector<4x512xi1>
    %182 = vector.broadcast %cst_71 : f32 to vector<4x512xf32>
    %183 = arith.select %181, %179, %182 : vector<4x512xi1>, vector<4x512xf32>
    %c28 = arith.constant 28 : index
    %c0_72 = arith.constant 0 : index
    %184 = vector.load %arg13[%c28, %c0_72] : memref<36x512xf32, #tpu.memory_space<vmem>>, vector<4x512xf32>
    tpu.vector_store %arg13[%c28, %c0_72], %183 {strides = array<i32>} : memref<36x512xf32, #tpu.memory_space<vmem>>, vector<4x512xf32>,
    %c495_i32 = arith.constant 495 : i32
    %185 = tpu.dynamic_rotate %137 by %c495_i32 dim 1 : vector<4x512xf32>, i32 -> vector<4x512xf32>
    %cst_73 = arith.constant 0.000000e+00 : f32
    %186 = vector.shape_cast %136 : vector<1x512xi1> to vector<1x512xi1>
    %187 = vector.broadcast %186 : vector<1x512xi1> to vector<4x512xi1>
    %188 = vector.broadcast %cst_73 : f32 to vector<4x512xf32>
    %189 = arith.select %187, %185, %188 : vector<4x512xi1>, vector<4x512xf32>
    %c32 = arith.constant 32 : index
    %c0_74 = arith.constant 0 : index
    %190 = vector.load %arg13[%c32, %c0_74] : memref<36x512xf32, #tpu.memory_space<vmem>>, vector<4x512xf32>
    tpu.vector_store %arg13[%c32, %c0_74], %189 {strides = array<i32>} : memref<36x512xf32, #tpu.memory_space<vmem>>, vector<4x512xf32>,
    %c0_75 = arith.constant 0 : index
    %c0_76 = arith.constant 0 : index
    %191 = vector.load %arg13[%c0_75, %c0_76] : memref<36x512xf32, #tpu.memory_space<vmem>>, vector<36x512xf32>
    %c0_77 = arith.constant 0 : index
    %c0_78 = arith.constant 0 : index
    %192 = vector.load %arg4[%c0_77, %c0_78] : memref<8x36xf32, #tpu.memory_space<vmem>>, vector<8x36xf32>
    %cst_79 = arith.constant dense<0.000000e+00> : vector<8x512xf32>
    %193 = tpu.matmul %192, %191, %cst_79 {dimension_numbers = #tpu.dot_dimension_numbers<[1], [0], [0], [1], [0, 0, 1, 1], [], []>} : vector<8x36xf32>, vector<36x512xf32>, vector<8x512xf32> -> vector<8x512xf32>
    %c0_80 = arith.constant 0 : index
    %c0_81 = arith.constant 0 : index
    %194 = vector.load %arg5[%c0_80, %c0_81] : memref<8x1xf32, #tpu.memory_space<vmem>>, vector<8x1xf32>
    %195 = vector.broadcast %194 : vector<8x1xf32> to vector<8x512xf32>
    %196 = arith.addf %193, %195 : vector<8x512xf32>
    %cst_82 = arith.constant 0.000000e+00 : f32
    %197 = vector.broadcast %cst_82 : f32 to vector<8x512xf32>
    %198 = arith.maximumf %196, %197 : vector<8x512xf32>
    %cst_83 = arith.constant dense<0.000000e+00> : vector<8xf32>
    %199 = vector.multi_reduction <add>, %198, %cst_83 [1] : vector<8x512xf32> to vector<8xf32>
    %200 = vector.shape_cast %199 : vector<8xf32> to vector<8x1xf32>
    %cst_84 = arith.constant 5.120000e+02 : f32
    %201 = vector.broadcast %cst_84 : f32 to vector<8x1xf32>
    %202 = arith.divf %200, %201 : vector<8x1xf32>
    %203 = vector.broadcast %202 : vector<8x1xf32> to vector<8x512xf32>
    %204 = arith.subf %198, %203 : vector<8x512xf32>
    %205 = arith.mulf %204, %204 : vector<8x512xf32>
    %cst_85 = arith.constant dense<0.000000e+00> : vector<8xf32>
    %206 = vector.multi_reduction <add>, %205, %cst_85 [1] : vector<8x512xf32> to vector<8xf32>
    %207 = vector.shape_cast %206 : vector<8xf32> to vector<8x1xf32>
    %cst_86 = arith.constant 5.120000e+02 : f32
    %208 = vector.broadcast %cst_86 : f32 to vector<8x1xf32>
    %209 = arith.divf %207, %208 : vector<8x1xf32>
    %c0_87 = arith.constant 0 : index
    %c0_88 = arith.constant 0 : index
    %210 = vector.load %arg6[%c0_87, %c0_88] : memref<8x1xf32, #tpu.memory_space<vmem>>, vector<8x1xf32>
    %cst_89 = arith.constant 9.99999974E-6 : f32
    %211 = vector.broadcast %cst_89 : f32 to vector<8x1xf32>
    %212 = arith.addf %209, %211 : vector<8x1xf32>
    %213 = math.rsqrt %212 : vector<8x1xf32>
    %214 = arith.mulf %210, %213 : vector<8x1xf32>
    %215 = vector.broadcast %214 : vector<8x1xf32> to vector<8x512xf32>
    %216 = arith.mulf %204, %215 : vector<8x512xf32>
    %c0_90 = arith.constant 0 : index
    %c0_91 = arith.constant 0 : index
    %217 = vector.load %arg7[%c0_90, %c0_91] : memref<8x1xf32, #tpu.memory_space<vmem>>, vector<8x1xf32>
    %218 = vector.broadcast %217 : vector<8x1xf32> to vector<8x512xf32>
    %219 = arith.addf %216, %218 : vector<8x512xf32>
    %c17_i32_92 = arith.constant 17 : i32
    %220 = tpu.dynamic_rotate %219 by %c17_i32_92 dim 1 : vector<8x512xf32>, i32 -> vector<8x512xf32>
    %cst_93 = arith.constant 0.000000e+00 : f32
    %221 = vector.shape_cast %16 : vector<1x512xi1> to vector<1x512xi1>
    %222 = vector.broadcast %221 : vector<1x512xi1> to vector<8x512xi1>
    %223 = vector.broadcast %cst_93 : f32 to vector<8x512xf32>
    %224 = arith.select %222, %220, %223 : vector<8x512xi1>, vector<8x512xf32>
    %c0_94 = arith.constant 0 : index
    %c0_95 = arith.constant 0 : index
    %225 = vector.load %arg14[%c0_94, %c0_95] : memref<72x512xf32, #tpu.memory_space<vmem>>, vector<8x512xf32>
    tpu.vector_store %arg14[%c0_94, %c0_95], %224 {strides = array<i32>} : memref<72x512xf32, #tpu.memory_space<vmem>>, vector<8x512xf32>,
    %c16_i32_96 = arith.constant 16 : i32
    %226 = tpu.dynamic_rotate %219 by %c16_i32_96 dim 1 : vector<8x512xf32>, i32 -> vector<8x512xf32>
    %cst_97 = arith.constant 0.000000e+00 : f32
    %227 = vector.shape_cast %31 : vector<1x512xi1> to vector<1x512xi1>
    %228 = vector.broadcast %227 : vector<1x512xi1> to vector<8x512xi1>
    %229 = vector.broadcast %cst_97 : f32 to vector<8x512xf32>
    %230 = arith.select %228, %226, %229 : vector<8x512xi1>, vector<8x512xf32>
    %c8_98 = arith.constant 8 : index
    %c0_99 = arith.constant 0 : index
    %231 = vector.load %arg14[%c8_98, %c0_99] : memref<72x512xf32, #tpu.memory_space<vmem>>, vector<8x512xf32>
    tpu.vector_store %arg14[%c8_98, %c0_99], %230 {strides = array<i32>} : memref<72x512xf32, #tpu.memory_space<vmem>>, vector<8x512xf32>,
    %c15_i32_100 = arith.constant 15 : i32
    %232 = tpu.dynamic_rotate %219 by %c15_i32_100 dim 1 : vector<8x512xf32>, i32 -> vector<8x512xf32>
    %cst_101 = arith.constant 0.000000e+00 : f32
    %233 = vector.shape_cast %46 : vector<1x512xi1> to vector<1x512xi1>
    %234 = vector.broadcast %233 : vector<1x512xi1> to vector<8x512xi1>
    %235 = vector.broadcast %cst_101 : f32 to vector<8x512xf32>
    %236 = arith.select %234, %232, %235 : vector<8x512xi1>, vector<8x512xf32>
    %c16_102 = arith.constant 16 : index
    %c0_103 = arith.constant 0 : index
    %237 = vector.load %arg14[%c16_102, %c0_103] : memref<72x512xf32, #tpu.memory_space<vmem>>, vector<8x512xf32>
    tpu.vector_store %arg14[%c16_102, %c0_103], %236 {strides = array<i32>} : memref<72x512xf32, #tpu.memory_space<vmem>>, vector<8x512xf32>,
    %c1_i32_104 = arith.constant 1 : i32
    %238 = tpu.dynamic_rotate %219 by %c1_i32_104 dim 1 : vector<8x512xf32>, i32 -> vector<8x512xf32>
    %cst_105 = arith.constant 0.000000e+00 : f32
    %239 = vector.shape_cast %61 : vector<1x512xi1> to vector<1x512xi1>
    %240 = vector.broadcast %239 : vector<1x512xi1> to vector<8x512xi1>
    %241 = vector.broadcast %cst_105 : f32 to vector<8x512xf32>
    %242 = arith.select %240, %238, %241 : vector<8x512xi1>, vector<8x512xf32>
    %c24_106 = arith.constant 24 : index
    %c0_107 = arith.constant 0 : index
    %243 = vector.load %arg14[%c24_106, %c0_107] : memref<72x512xf32, #tpu.memory_space<vmem>>, vector<8x512xf32>
    tpu.vector_store %arg14[%c24_106, %c0_107], %242 {strides = array<i32>} : memref<72x512xf32, #tpu.memory_space<vmem>>, vector<8x512xf32>,
    %cst_108 = arith.constant 0.000000e+00 : f32
    %244 = vector.shape_cast %76 : vector<1x512xi1> to vector<1x512xi1>
    %245 = vector.broadcast %244 : vector<1x512xi1> to vector<8x512xi1>
    %246 = vector.broadcast %cst_108 : f32 to vector<8x512xf32>
    %247 = arith.select %245, %219, %246 : vector<8x512xi1>, vector<8x512xf32>
    %c32_109 = arith.constant 32 : index
    %c0_110 = arith.constant 0 : index
    %248 = vector.load %arg14[%c32_109, %c0_110] : memref<72x512xf32, #tpu.memory_space<vmem>>, vector<8x512xf32>
    tpu.vector_store %arg14[%c32_109, %c0_110], %247 {strides = array<i32>} : memref<72x512xf32, #tpu.memory_space<vmem>>, vector<8x512xf32>,
    %c511_i32_111 = arith.constant 511 : i32
    %249 = tpu.dynamic_rotate %219 by %c511_i32_111 dim 1 : vector<8x512xf32>, i32 -> vector<8x512xf32>
    %cst_112 = arith.constant 0.000000e+00 : f32
    %250 = vector.shape_cast %91 : vector<1x512xi1> to vector<1x512xi1>
    %251 = vector.broadcast %250 : vector<1x512xi1> to vector<8x512xi1>
    %252 = vector.broadcast %cst_112 : f32 to vector<8x512xf32>
    %253 = arith.select %251, %249, %252 : vector<8x512xi1>, vector<8x512xf32>
    %c40 = arith.constant 40 : index
    %c0_113 = arith.constant 0 : index
    %254 = vector.load %arg14[%c40, %c0_113] : memref<72x512xf32, #tpu.memory_space<vmem>>, vector<8x512xf32>
    tpu.vector_store %arg14[%c40, %c0_113], %253 {strides = array<i32>} : memref<72x512xf32, #tpu.memory_space<vmem>>, vector<8x512xf32>,
    %c497_i32_114 = arith.constant 497 : i32
    %255 = tpu.dynamic_rotate %219 by %c497_i32_114 dim 1 : vector<8x512xf32>, i32 -> vector<8x512xf32>
    %cst_115 = arith.constant 0.000000e+00 : f32
    %256 = vector.shape_cast %106 : vector<1x512xi1> to vector<1x512xi1>
    %257 = vector.broadcast %256 : vector<1x512xi1> to vector<8x512xi1>
    %258 = vector.broadcast %cst_115 : f32 to vector<8x512xf32>
    %259 = arith.select %257, %255, %258 : vector<8x512xi1>, vector<8x512xf32>
    %c48 = arith.constant 48 : index
    %c0_116 = arith.constant 0 : index
    %260 = vector.load %arg14[%c48, %c0_116] : memref<72x512xf32, #tpu.memory_space<vmem>>, vector<8x512xf32>
    tpu.vector_store %arg14[%c48, %c0_116], %259 {strides = array<i32>} : memref<72x512xf32, #tpu.memory_space<vmem>>, vector<8x512xf32>,
    %c496_i32_117 = arith.constant 496 : i32
    %261 = tpu.dynamic_rotate %219 by %c496_i32_117 dim 1 : vector<8x512xf32>, i32 -> vector<8x512xf32>
    %cst_118 = arith.constant 0.000000e+00 : f32
    %262 = vector.shape_cast %121 : vector<1x512xi1> to vector<1x512xi1>
    %263 = vector.broadcast %262 : vector<1x512xi1> to vector<8x512xi1>
    %264 = vector.broadcast %cst_118 : f32 to vector<8x512xf32>
    %265 = arith.select %263, %261, %264 : vector<8x512xi1>, vector<8x512xf32>
    %c56 = arith.constant 56 : index
    %c0_119 = arith.constant 0 : index
    %266 = vector.load %arg14[%c56, %c0_119] : memref<72x512xf32, #tpu.memory_space<vmem>>, vector<8x512xf32>
    tpu.vector_store %arg14[%c56, %c0_119], %265 {strides = array<i32>} : memref<72x512xf32, #tpu.memory_space<vmem>>, vector<8x512xf32>,
    %c495_i32_120 = arith.constant 495 : i32
    %267 = tpu.dynamic_rotate %219 by %c495_i32_120 dim 1 : vector<8x512xf32>, i32 -> vector<8x512xf32>
    %cst_121 = arith.constant 0.000000e+00 : f32
    %268 = vector.shape_cast %136 : vector<1x512xi1> to vector<1x512xi1>
    %269 = vector.broadcast %268 : vector<1x512xi1> to vector<8x512xi1>
    %270 = vector.broadcast %cst_121 : f32 to vector<8x512xf32>
    %271 = arith.select %269, %267, %270 : vector<8x512xi1>, vector<8x512xf32>
    %c64 = arith.constant 64 : index
    %c0_122 = arith.constant 0 : index
    %272 = vector.load %arg14[%c64, %c0_122] : memref<72x512xf32, #tpu.memory_space<vmem>>, vector<8x512xf32>
    tpu.vector_store %arg14[%c64, %c0_122], %271 {strides = array<i32>} : memref<72x512xf32, #tpu.memory_space<vmem>>, vector<8x512xf32>,
    %c0_123 = arith.constant 0 : index
    %c0_124 = arith.constant 0 : index
    %273 = vector.load %arg14[%c0_123, %c0_124] : memref<72x512xf32, #tpu.memory_space<vmem>>, vector<72x512xf32>
    %c0_125 = arith.constant 0 : index
    %c0_126 = arith.constant 0 : index
    %274 = vector.load %arg8[%c0_125, %c0_126] : memref<8x72xf32, #tpu.memory_space<vmem>>, vector<8x72xf32>
    %cst_127 = arith.constant dense<0.000000e+00> : vector<8x512xf32>
    %275 = tpu.matmul %274, %273, %cst_127 {dimension_numbers = #tpu.dot_dimension_numbers<[1], [0], [0], [1], [0, 0, 1, 1], [], []>} : vector<8x72xf32>, vector<72x512xf32>, vector<8x512xf32> -> vector<8x512xf32>
    %c0_128 = arith.constant 0 : index
    %c0_129 = arith.constant 0 : index
    %276 = vector.load %arg9[%c0_128, %c0_129] : memref<8x1xf32, #tpu.memory_space<vmem>>, vector<8x1xf32>
    %277 = vector.broadcast %276 : vector<8x1xf32> to vector<8x512xf32>
    %278 = arith.addf %275, %277 : vector<8x512xf32>
    %cst_130 = arith.constant 0.000000e+00 : f32
    %279 = vector.broadcast %cst_130 : f32 to vector<8x512xf32>
    %280 = arith.maximumf %278, %279 : vector<8x512xf32>
    %cst_131 = arith.constant dense<0.000000e+00> : vector<8xf32>
    %281 = vector.multi_reduction <add>, %280, %cst_131 [1] : vector<8x512xf32> to vector<8xf32>
    %282 = vector.shape_cast %281 : vector<8xf32> to vector<8x1xf32>
    %cst_132 = arith.constant 5.120000e+02 : f32
    %283 = vector.broadcast %cst_132 : f32 to vector<8x1xf32>
    %284 = arith.divf %282, %283 : vector<8x1xf32>
    %285 = vector.broadcast %284 : vector<8x1xf32> to vector<8x512xf32>
    %286 = arith.subf %280, %285 : vector<8x512xf32>
    %287 = arith.mulf %286, %286 : vector<8x512xf32>
    %cst_133 = arith.constant dense<0.000000e+00> : vector<8xf32>
    %288 = vector.multi_reduction <add>, %287, %cst_133 [1] : vector<8x512xf32> to vector<8xf32>
    %289 = vector.shape_cast %288 : vector<8xf32> to vector<8x1xf32>
    %cst_134 = arith.constant 5.120000e+02 : f32
    %290 = vector.broadcast %cst_134 : f32 to vector<8x1xf32>
    %291 = arith.divf %289, %290 : vector<8x1xf32>
    %c0_135 = arith.constant 0 : index
    %c0_136 = arith.constant 0 : index
    %292 = vector.load %arg10[%c0_135, %c0_136] : memref<8x1xf32, #tpu.memory_space<vmem>>, vector<8x1xf32>
    %cst_137 = arith.constant 9.99999974E-6 : f32
    %293 = vector.broadcast %cst_137 : f32 to vector<8x1xf32>
    %294 = arith.addf %291, %293 : vector<8x1xf32>
    %295 = math.rsqrt %294 : vector<8x1xf32>
    %296 = arith.mulf %292, %295 : vector<8x1xf32>
    %297 = vector.broadcast %296 : vector<8x1xf32> to vector<8x512xf32>
    %298 = arith.mulf %286, %297 : vector<8x512xf32>
    %c0_138 = arith.constant 0 : index
    %c0_139 = arith.constant 0 : index
    %299 = vector.load %arg11[%c0_138, %c0_139] : memref<8x1xf32, #tpu.memory_space<vmem>>, vector<8x1xf32>
    %300 = vector.broadcast %299 : vector<8x1xf32> to vector<8x512xf32>
    %301 = arith.addf %298, %300 : vector<8x512xf32>
    %c511_i32_140 = arith.constant 511 : i32
    %302 = tpu.dynamic_rotate %301 by %c511_i32_140 dim 1 : vector<8x512xf32>, i32 -> vector<8x512xf32>
    %303 = arith.maximumf %301, %302 : vector<8x512xf32>
    %c496_i32_141 = arith.constant 496 : i32
    %304 = tpu.dynamic_rotate %303 by %c496_i32_141 dim 1 : vector<8x512xf32>, i32 -> vector<8x512xf32>
    %305 = arith.maximumf %303, %304 : vector<8x512xf32>
    %306 = tpu.iota {dimensions = array<i32: 0>} : vector<512x128xi32>
    %c0_142 = arith.constant 0 : index
    %c0_143 = arith.constant 0 : index
    %307 = vector.load %arg3[%c0_142, %c0_143] : memref<1x128xi32, #tpu.memory_space<vmem>>, vector<1x128xi32>
    %308 = vector.broadcast %307 : vector<1x128xi32> to vector<512x128xi32>
    %309 = arith.cmpi eq, %306, %308 : vector<512x128xi32>
    %cst_144 = arith.constant 1.000000e+00 : f32
    %cst_145 = arith.constant 0.000000e+00 : f32
    %310 = vector.broadcast %cst_144 : f32 to vector<512x128xf32>
    %311 = vector.broadcast %cst_145 : f32 to vector<512x128xf32>
    %312 = arith.select %309, %310, %311 : vector<512x128xi1>, vector<512x128xf32>
    %cst_146 = arith.constant dense<0.000000e+00> : vector<8x128xf32>
    %313 = tpu.matmul %305, %312, %cst_146 {dimension_numbers = #tpu.dot_dimension_numbers<[1], [0], [0], [1], [0, 0, 1, 1], [], []>} : vector<8x512xf32>, vector<512x128xf32>, vector<8x128xf32> -> vector<8x128xf32>
    %c0_147 = arith.constant 0 : index
    %c0_148 = arith.constant 0 : index
    %314 = vector.load %arg12[%c0_147, %c0_148] : memref<8x128xf32, #tpu.memory_space<vmem>>, vector<8x128xf32>
    tpu.vector_store %arg12[%c0_147, %c0_148], %313 {strides = array<i32>} : memref<8x128xf32, #tpu.memory_space<vmem>>, vector<8x128xf32>,
    return
  }
}

</mosaic_0001>

<llo_original>
// kernel: block_forward.1
$region0: #{block_forward.1}
  #allocation0 [shape = 'u32[]', space=smem, size = 0x4, offset = 0x4, fixed_abs, tag = 'smem constant byte address 0x4 - core index']
  #allocation1 [shape = 'u32[144,128]{1,0:T(1,128)}', space=vmem, size = 0x12000, scoped, tag = 'internal scratch']
  #allocation2 [shape = 'f32[36,512]{1,0:T(8,128)}', space=vmem, size = 0x14000, scoped, tag = 'scratch operand']
  #allocation3 [shape = 'f32[72,512]{1,0:T(8,128)}', space=vmem, size = 0x24000, scoped, tag = 'scratch operand']
  %s0 = inlined_call_operand.vmem [shape: f32[4,512], index: 0, kind: input, shape index: {}]
  %s1 = inlined_call_operand.vmem [shape: s32[1,512], index: 1, kind: input, shape index: {}]
  %s2 = inlined_call_operand.vmem [shape: s32[1,512], index: 2, kind: input, shape index: {}]
  %s3 = inlined_call_operand.vmem [shape: s32[1,128], index: 3, kind: input, shape index: {}]
  %s4 = inlined_call_operand.vmem [shape: f32[8,36], index: 4, kind: input, shape index: {}]
  %s5 = inlined_call_operand.vmem [shape: f32[8,1], index: 5, kind: input, shape index: {}]
  %s6 = inlined_call_operand.vmem [shape: f32[8,1], index: 6, kind: input, shape index: {}]
  %s7 = inlined_call_operand.vmem [shape: f32[8,1], index: 7, kind: input, shape index: {}]
  %s8 = inlined_call_operand.vmem [shape: f32[8,72], index: 8, kind: input, shape index: {}]
  %s9 = inlined_call_operand.vmem [shape: f32[8,1], index: 9, kind: input, shape index: {}]
  %s10 = inlined_call_operand.vmem [shape: f32[8,1], index: 10, kind: input, shape index: {}]
  %s11 = inlined_call_operand.vmem [shape: f32[8,1], index: 11, kind: input, shape index: {}]
  %s12 = inlined_call_operand.vmem [shape: f32[8,128], index: 12, kind: output, shape index: {}]
  %s13 = sld [smem:[#allocation0]]
  $region58: #{block_forward.1} parent=0
    _
  %s15 = ssub.s32 1, %s13
  %s16 = scalar_select 0, %s15, %s13
  // Predicated region
  $region2: #{block_forward.1} parent=0 // pred_check
    _
  $region3: #{block_forward.1} parent=0 // pred_check_branch
    %18 = sbr.rel (0) target = $region5
  $region4: #{block_forward.1} parent=0 // pred_region
    _
  $region5: #{block_forward.1} parent=0 // pred_fallthru
    _
  // Predicated region
  $region6: #{block_forward.1} parent=0 // pred_check
    _
  $region7: #{block_forward.1} parent=0 // pred_check_branch
    %20 = sbr.rel (0) target = $region9
  $region8: #{block_forward.1} parent=0 // pred_region
    _
  $region9: #{block_forward.1} parent=0 // pred_fallthru
    _
  // Predicated region
  $region10: #{block_forward.1} parent=0 // pred_check
    _
  $region11: #{block_forward.1} parent=0 // pred_check_branch
    %22 = sbr.rel (0) target = $region13
  $region12: #{block_forward.1} parent=0 // pred_region
    _
  $region13: #{block_forward.1} parent=0 // pred_fallthru
    _
  // Predicated region
  $region14: #{block_forward.1} parent=0 // pred_check
    _
  $region15: #{block_forward.1} parent=0 // pred_check_branch
    %24 = sbr.rel (0) target = $region17
  $region16: #{block_forward.1} parent=0 // pred_region
    _
  $region17: #{block_forward.1} parent=0 // pred_fallthru
    _
  // Predicated region
  $region18: #{block_forward.1} parent=0 // pred_check
    _
  $region19: #{block_forward.1} parent=0 // pred_check_branch
    %26 = sbr.rel (0) target = $region21
  $region20: #{block_forward.1} parent=0 // pred_region
    _
  $region21: #{block_forward.1} parent=0 // pred_fallthru
    _
  // Predicated region
  $region22: #{block_forward.1} parent=0 // pred_check
    _
  $region23: #{block_forward.1} parent=0 // pred_check_branch
    %28 = sbr.rel (0) target = $region25
  $region24: #{block_forward.1} parent=0 // pred_region
    _
  $region25: #{block_forward.1} parent=0 // pred_fallthru
    _
  // Predicated region
  $region26: #{block_forward.1} parent=0 // pred_check
    _
  $region27: #{block_forward.1} parent=0 // pred_check_branch
    %30 = sbr.rel (0) target = $region29
  $region28: #{block_forward.1} parent=0 // pred_region
    _
  $region29: #{block_forward.1} parent=0 // pred_fallthru
    _
  // Predicated region
  $region30: #{block_forward.1} parent=0 // pred_check
    _
  $region31: #{block_forward.1} parent=0 // pred_check_branch
    %32 = sbr.rel (0) target = $region33
  $region32: #{block_forward.1} parent=0 // pred_region
    _
  $region33: #{block_forward.1} parent=0 // pred_fallthru
    _
  // Predicated region
  $region34: #{block_forward.1} parent=0 // pred_check
    _
  $region35: #{block_forward.1} parent=0 // pred_check_branch
    %34 = sbr.rel (0) target = $region37
  $region36: #{block_forward.1} parent=0 // pred_region
    _
  $region37: #{block_forward.1} parent=0 // pred_fallthru
    _
  // Predicated region
  $region38: #{block_forward.1} parent=0 // pred_check
    _
  $region39: #{block_forward.1} parent=0 // pred_check_branch
    %36 = sbr.rel (0) target = $region41
  $region40: #{block_forward.1} parent=0 // pred_region
    _
  $region41: #{block_forward.1} parent=0 // pred_fallthru
    _
  // Predicated region
  $region42: #{block_forward.1} parent=0 // pred_check
    _
  $region43: #{block_forward.1} parent=0 // pred_check_branch
    %38 = sbr.rel (0) target = $region45
  $region44: #{block_forward.1} parent=0 // pred_region
    _
  $region45: #{block_forward.1} parent=0 // pred_fallthru
    _
  // Predicated region
  $region46: #{block_forward.1} parent=0 // pred_check
    _
  $region47: #{block_forward.1} parent=0 // pred_check_branch
    %40 = sbr.rel (0) target = $region49
  $region48: #{block_forward.1} parent=0 // pred_region
    _
  $region49: #{block_forward.1} parent=0 // pred_fallthru
    _
  %v41 = vld [vmem:[%s1] sm:$0xf]
  %v42 = vld [vmem:[%s2] sm:$0xf]
  %v43 = vadd.s32 %v41, 4294967295
  %v44 = vadd.s32 %v42, 4294967295
  %vm45 = vcmp.ge.s32.totalorder %v43, 0
  %vm46 = vcmp.lt.s32.totalorder %v43, 16
  %vm47 = vmand %vm45, %vm46
  %vm48 = vcmp.ge.s32.totalorder %v44, 0
  %vm49 = vcmp.lt.s32.totalorder %v44, 16
  %vm50 = vmand %vm48, %vm49
  %vm51 = vmand %vm47, %vm50
  %vm52 = vcmp.ge.s32.totalorder %v42, 0
  %vm53 = vcmp.lt.s32.totalorder %v42, 16
  %vm54 = vmand %vm52, %vm53
  %vm55 = vmand %vm47, %vm54
  %v56 = vadd.s32 %v42, 1
  %vm57 = vcmp.ge.s32.totalorder %v56, 0
  %vm58 = vcmp.lt.s32.totalorder %v56, 16
  %vm59 = vmand %vm57, %vm58
  %vm60 = vmand %vm47, %vm59
  %vm61 = vcmp.ge.s32.totalorder %v41, 0
  %vm62 = vcmp.lt.s32.totalorder %v41, 16
  %vm63 = vmand %vm61, %vm62
  %vm64 = vmand %vm63, %vm50
  %vm65 = vmand %vm63, %vm54
  %vm66 = vmand %vm63, %vm59
  %v67 = vadd.s32 %v41, 1
  %vm68 = vcmp.ge.s32.totalorder %v67, 0
  %vm69 = vcmp.lt.s32.totalorder %v67, 16
  %vm70 = vmand %vm68, %vm69
  %vm71 = vmand %vm70, %vm50
  %vm72 = vmand %vm70, %vm54
  %vm73 = vmand %vm70, %vm59
  %v74 = vld [vmem:[%s0] sm:$0xff]
  %v75 = vld [vmem:[%s0 + $0x8] sm:$0xff]
  %v78 = vcombine.high %v74, %v74
  %v79 = vcombine.high %v75, %v75
  %82 = vrot.lane.b32.xlu0 %v74, 17
  %v83 = vpop.permute.xlu0 %82
  %84 = vrot.lane.b32.xlu0 %v78, 17
  %v85 = vpop.permute.xlu0 %84
  %86 = vrot.lane.b32.xlu0 %v75, 17
  %v87 = vpop.permute.xlu0 %86
  %88 = vrot.lane.b32.xlu0 %v79, 17
  %v89 = vpop.permute.xlu0 %88
  %v90 = vlaneseq
  %v91 = vand.u32 %v90, 127
  %vm92 = vcmp.lt.s32.totalorder %v91, 17
  %v93 = vsel %vm92, %v87, %v89
  %v94 = vsel %vm92, %v85, %v87
  %v95 = vsel %vm92, %v83, %v85
  %v96 = vsel %vm92, %v89, %v83
  %v97 = vsel %vm51, 1, 0
  %v98 = vlaneseq
  %v99 = vshrl.u32 %v98, 7
  %v100 = vsub.s32 0, %v99
  %v101 = vrot.slane %v97, %v100
  %v102 = vlaneseq
  %v103 = vshrl.u32 %v102, 7
  %v104 = vsub.s32 1, %v103
  %v105 = vrot.slane %v97, %v104
  %v106 = vlaneseq
  %v107 = vshrl.u32 %v106, 7
  %v108 = vsub.s32 2, %v107
  %v109 = vrot.slane %v97, %v108
  %v110 = vlaneseq
  %v111 = vshrl.u32 %v110, 7
  %v112 = vsub.s32 3, %v111
  %v113 = vrot.slane %v97, %v112
  %vm114 = vcmp.eq.s32.totalorder %v101, 1
  %vm115 = vcmp.eq.s32.totalorder %v105, 1
  %vm116 = vcmp.eq.s32.totalorder %v109, 1
  %vm117 = vcmp.eq.s32.totalorder %v113, 1
  %v118 = vsel %vm114, %v96, 0.0
  %v119 = vsel %vm115, %v95, 0.0
  %v120 = vsel %vm116, %v94, 0.0
  %v121 = vsel %vm117, %v93, 0.0
  %122 = vst [vmem:[#allocation2] sm:$0xf] %v118
  %123 = vst [vmem:[#allocation2 + $0x8] sm:$0xf] %v119
  %124 = vst [vmem:[#allocation2 + $0x10] sm:$0xf] %v120
  %125 = vst [vmem:[#allocation2 + $0x18] sm:$0xf] %v121
  %126 = vrot.lane.b32.xlu0 %v74, 16
  %v127 = vpop.permute.xlu0 %126
  %128 = vrot.lane.b32.xlu0 %v78, 16
  %v129 = vpop.permute.xlu0 %128
  %130 = vrot.lane.b32.xlu0 %v75, 16
  %v131 = vpop.permute.xlu0 %130
  %132 = vrot.lane.b32.xlu0 %v79, 16
  %v133 = vpop.permute.xlu0 %132
  %vm134 = vcmp.lt.s32.totalorder %v91, 16
  %v135 = vsel %vm134, %v131, %v133
  %v136 = vsel %vm134, %v129, %v131
  %v137 = vsel %vm134, %v127, %v129
  %v138 = vsel %vm134, %v133, %v127
  %v139 = vsel %vm55, 1, 0
  %v140 = vlaneseq
  %v141 = vshrl.u32 %v140, 7
  %v142 = vsub.s32 0, %v141
  %v143 = vrot.slane %v139, %v142
  %v144 = vlaneseq
  %v145 = vshrl.u32 %v144, 7
  %v146 = vsub.s32 1, %v145
  %v147 = vrot.slane %v139, %v146
  %v148 = vlaneseq
  %v149 = vshrl.u32 %v148, 7
  %v150 = vsub.s32 2, %v149
  %v151 = vrot.slane %v139, %v150
  %v152 = vlaneseq
  %v153 = vshrl.u32 %v152, 7
  %v154 = vsub.s32 3, %v153
  %v155 = vrot.slane %v139, %v154
  %vm156 = vcmp.eq.s32.totalorder %v143, 1
  %vm157 = vcmp.eq.s32.totalorder %v147, 1
  %vm158 = vcmp.eq.s32.totalorder %v151, 1
  %vm159 = vcmp.eq.s32.totalorder %v155, 1
  %v160 = vsel %vm156, %v138, 0.0
  %v161 = vsel %vm157, %v137, 0.0
  %v162 = vsel %vm158, %v136, 0.0
  %v163 = vsel %vm159, %v135, 0.0
  %v168 = vrot.slane %v160, 4
  %v169 = vrot.slane %v161, 4
  %v170 = vrot.slane %v162, 4
  %v171 = vrot.slane %v163, 4
  %176 = vst [vmem:[#allocation2] sm:$0xf0] %v168
  %177 = vst [vmem:[#allocation2 + $0x8] sm:$0xf0] %v169
  %178 = vst [vmem:[#allocation2 + $0x10] sm:$0xf0] %v170
  %179 = vst [vmem:[#allocation2 + $0x18] sm:$0xf0] %v171
  %180 = vrot.lane.b32.xlu0 %v74, 15
  %v181 = vpop.permute.xlu0 %180
  %182 = vrot.lane.b32.xlu0 %v78, 15
  %v183 = vpop.permute.xlu0 %182
  %184 = vrot.lane.b32.xlu0 %v75, 15
  %v185 = vpop.permute.xlu0 %184
  %186 = vrot.lane.b32.xlu0 %v79, 15
  %v187 = vpop.permute.xlu0 %186
  %vm188 = vcmp.lt.s32.totalorder %v91, 15
  %v189 = vsel %vm188, %v185, %v187
  %v190 = vsel %vm188, %v183, %v185
  %v191 = vsel %vm188, %v181, %v183
  %v192 = vsel %vm188, %v187, %v181
  %v193 = vsel %vm60, 1, 0
  %v194 = vlaneseq
  %v195 = vshrl.u32 %v194, 7
  %v196 = vsub.s32 0, %v195
  %v197 = vrot.slane %v193, %v196
  %v198 = vlaneseq
  %v199 = vshrl.u32 %v198, 7
  %v200 = vsub.s32 1, %v199
  %v201 = vrot.slane %v193, %v200
  %v202 = vlaneseq
  %v203 = vshrl.u32 %v202, 7
  %v204 = vsub.s32 2, %v203
  %v205 = vrot.slane %v193, %v204
  %v206 = vlaneseq
  %v207 = vshrl.u32 %v206, 7
  %v208 = vsub.s32 3, %v207
  %v209 = vrot.slane %v193, %v208
  %vm210 = vcmp.eq.s32.totalorder %v197, 1
  %vm211 = vcmp.eq.s32.totalorder %v201, 1
  %vm212 = vcmp.eq.s32.totalorder %v205, 1
  %vm213 = vcmp.eq.s32.totalorder %v209, 1
  %v214 = vsel %vm210, %v192, 0.0
  %v215 = vsel %vm211, %v191, 0.0
  %v216 = vsel %vm212, %v190, 0.0
  %v217 = vsel %vm213, %v189, 0.0
  %218 = vst [vmem:[#allocation2 + $0x20] sm:$0xf] %v214
  %219 = vst [vmem:[#allocation2 + $0x28] sm:$0xf] %v215
  %220 = vst [vmem:[#allocation2 + $0x30] sm:$0xf] %v216
  %221 = vst [vmem:[#allocation2 + $0x38] sm:$0xf] %v217
  %222 = vrot.lane.b32.xlu0 %v74, 1
  %v223 = vpop.permute.xlu0 %222
  %224 = vrot.lane.b32.xlu0 %v78, 1
  %v225 = vpop.permute.xlu0 %224
  %226 = vrot.lane.b32.xlu0 %v75, 1
  %v227 = vpop.permute.xlu0 %226
  %228 = vrot.lane.b32.xlu0 %v79, 1
  %v229 = vpop.permute.xlu0 %228
  %vm230 = vcmp.lt.s32.totalorder %v91, 1
  %v231 = vsel %vm230, %v227, %v229
  %v232 = vsel %vm230, %v225, %v227
  %v233 = vsel %vm230, %v223, %v225
  %v234 = vsel %vm230, %v229, %v223
  %v235 = vsel %vm64, 1, 0
  %v236 = vlaneseq
  %v237 = vshrl.u32 %v236, 7
  %v238 = vsub.s32 0, %v237
  %v239 = vrot.slane %v235, %v238
  %v240 = vlaneseq
  %v241 = vshrl.u32 %v240, 7
  %v242 = vsub.s32 1, %v241
  %v243 = vrot.slane %v235, %v242
  %v244 = vlaneseq
  %v245 = vshrl.u32 %v244, 7
  %v246 = vsub.s32 2, %v245
  %v247 = vrot.slane %v235, %v246
  %v248 = vlaneseq
  %v249 = vshrl.u32 %v248, 7
  %v250 = vsub.s32 3, %v249
  %v251 = vrot.slane %v235, %v250
  %vm252 = vcmp.eq.s32.totalorder %v239, 1
  %vm253 = vcmp.eq.s32.totalorder %v243, 1
  %vm254 = vcmp.eq.s32.totalorder %v247, 1
  %vm255 = vcmp.eq.s32.totalorder %v251, 1
  %v256 = vsel %vm252, %v234, 0.0
  %v257 = vsel %vm253, %v233, 0.0
  %v258 = vsel %vm254, %v232, 0.0
  %v259 = vsel %vm255, %v231, 0.0
  %v264 = vrot.slane %v256, 4
  %v265 = vrot.slane %v257, 4
  %v266 = vrot.slane %v258, 4
  %v267 = vrot.slane %v259, 4
  %272 = vst [vmem:[#allocation2 + $0x20] sm:$0xf0] %v264
  %273 = vst [vmem:[#allocation2 + $0x28] sm:$0xf0] %v265
  %274 = vst [vmem:[#allocation2 + $0x30] sm:$0xf0] %v266
  %275 = vst [vmem:[#allocation2 + $0x38] sm:$0xf0] %v267
  %v276 = vsel %vm65, 1, 0
  %v277 = vlaneseq
  %v278 = vshrl.u32 %v277, 7
  %v279 = vsub.s32 0, %v278
  %v280 = vrot.slane %v276, %v279
  %v281 = vlaneseq
  %v282 = vshrl.u32 %v281, 7
  %v283 = vsub.s32 1, %v282
  %v284 = vrot.slane %v276, %v283
  %v285 = vlaneseq
  %v286 = vshrl.u32 %v285, 7
  %v287 = vsub.s32 2, %v286
  %v288 = vrot.slane %v276, %v287
  %v289 = vlaneseq
  %v290 = vshrl.u32 %v289, 7
  %v291 = vsub.s32 3, %v290
  %v292 = vrot.slane %v276, %v291
  %vm293 = vcmp.eq.s32.totalorder %v280, 1
  %vm294 = vcmp.eq.s32.totalorder %v284, 1
  %vm295 = vcmp.eq.s32.totalorder %v288, 1
  %vm296 = vcmp.eq.s32.totalorder %v292, 1
  %v297 = vsel %vm293, %v74, 0.0
  %v298 = vsel %vm294, %v78, 0.0
  %v299 = vsel %vm295, %v75, 0.0
  %v300 = vsel %vm296, %v79, 0.0
  %301 = vst [vmem:[#allocation2 + $0x40] sm:$0xf] %v297
  %302 = vst [vmem:[#allocation2 + $0x48] sm:$0xf] %v298
  %303 = vst [vmem:[#allocation2 + $0x50] sm:$0xf] %v299
  %304 = vst [vmem:[#allocation2 + $0x58] sm:$0xf] %v300
  %305 = vrot.lane.b32.xlu0 %v74, 127
  %v306 = vpop.permute.xlu0 %305
  %307 = vrot.lane.b32.xlu0 %v78, 127
  %v308 = vpop.permute.xlu0 %307
  %309 = vrot.lane.b32.xlu0 %v75, 127
  %v310 = vpop.permute.xlu0 %309
  %311 = vrot.lane.b32.xlu0 %v79, 127
  %v312 = vpop.permute.xlu0 %311
  %vm313 = vcmp.lt.s32.totalorder %v91, 127
  %v314 = vsel %vm313, %v310, %v312
  %v315 = vsel %vm313, %v308, %v310
  %v316 = vsel %vm313, %v306, %v308
  %v317 = vsel %vm313, %v312, %v306
  %v318 = vsel %vm66, 1, 0
  %v319 = vlaneseq
  %v320 = vshrl.u32 %v319, 7
  %v321 = vsub.s32 0, %v320
  %v322 = vrot.slane %v318, %v321
  %v323 = vlaneseq
  %v324 = vshrl.u32 %v323, 7
  %v325 = vsub.s32 1, %v324
  %v326 = vrot.slane %v318, %v325
  %v327 = vlaneseq
  %v328 = vshrl.u32 %v327, 7
  %v329 = vsub.s32 2, %v328
  %v330 = vrot.slane %v318, %v329
  %v331 = vlaneseq
  %v332 = vshrl.u32 %v331, 7
  %v333 = vsub.s32 3, %v332
  %v334 = vrot.slane %v318, %v333
  %vm335 = vcmp.eq.s32.totalorder %v322, 1
  %vm336 = vcmp.eq.s32.totalorder %v326, 1
  %vm337 = vcmp.eq.s32.totalorder %v330, 1
  %vm338 = vcmp.eq.s32.totalorder %v334, 1
  %v339 = vsel %vm335, %v316, 0.0
  %v340 = vsel %vm336, %v315, 0.0
  %v341 = vsel %vm337, %v314, 0.0
  %v342 = vsel %vm338, %v317, 0.0
  %v347 = vrot.slane %v339, 4
  %v348 = vrot.slane %v340, 4
  %v349 = vrot.slane %v341, 4
  %v350 = vrot.slane %v342, 4
  %355 = vst [vmem:[#allocation2 + $0x40] sm:$0xf0] %v347
  %356 = vst [vmem:[#allocation2 + $0x48] sm:$0xf0] %v348
  %357 = vst [vmem:[#allocation2 + $0x50] sm:$0xf0] %v349
  %358 = vst [vmem:[#allocation2 + $0x58] sm:$0xf0] %v350
  %359 = vrot.lane.b32.xlu0 %v74, 113
  %v360 = vpop.permute.xlu0 %359
  %361 = vrot.lane.b32.xlu0 %v78, 113
  %v362 = vpop.permute.xlu0 %361
  %363 = vrot.lane.b32.xlu0 %v75, 113
  %v364 = vpop.permute.xlu0 %363
  %365 = vrot.lane.b32.xlu0 %v79, 113
  %v366 = vpop.permute.xlu0 %365
  %vm367 = vcmp.lt.s32.totalorder %v91, 113
  %v368 = vsel %vm367, %v364, %v366
  %v369 = vsel %vm367, %v362, %v364
  %v370 = vsel %vm367, %v360, %v362
  %v371 = vsel %vm367, %v366, %v360
  %v372 = vsel %vm71, 1, 0
  %v373 = vlaneseq
  %v374 = vshrl.u32 %v373, 7
  %v375 = vsub.s32 0, %v374
  %v376 = vrot.slane %v372, %v375
  %v377 = vlaneseq
  %v378 = vshrl.u32 %v377, 7
  %v379 = vsub.s32 1, %v378
  %v380 = vrot.slane %v372, %v379
  %v381 = vlaneseq
  %v382 = vshrl.u32 %v381, 7
  %v383 = vsub.s32 2, %v382
  %v384 = vrot.slane %v372, %v383
  %v385 = vlaneseq
  %v386 = vshrl.u32 %v385, 7
  %v387 = vsub.s32 3, %v386
  %v388 = vrot.slane %v372, %v387
  %vm389 = vcmp.eq.s32.totalorder %v376, 1
  %vm390 = vcmp.eq.s32.totalorder %v380, 1
  %vm391 = vcmp.eq.s32.totalorder %v384, 1
  %vm392 = vcmp.eq.s32.totalorder %v388, 1
  %v393 = vsel %vm389, %v370, 0.0
  %v394 = vsel %vm390, %v369, 0.0
  %v395 = vsel %vm391, %v368, 0.0
  %v396 = vsel %vm392, %v371, 0.0
  %397 = vst [vmem:[#allocation2 + $0x60] sm:$0xf] %v393
  %398 = vst [vmem:[#allocation2 + $0x68] sm:$0xf] %v394
  %399 = vst [vmem:[#allocation2 + $0x70] sm:$0xf] %v395
  %400 = vst [vmem:[#allocation2 + $0x78] sm:$0xf] %v396
  %401 = vrot.lane.b32.xlu0 %v74, 112
  %v402 = vpop.permute.xlu0 %401
  %403 = vrot.lane.b32.xlu0 %v78, 112
  %v404 = vpop.permute.xlu0 %403
  %405 = vrot.lane.b32.xlu0 %v75, 112
  %v406 = vpop.permute.xlu0 %405
  %407 = vrot.lane.b32.xlu0 %v79, 112
  %v408 = vpop.permute.xlu0 %407
  %vm409 = vcmp.lt.s32.totalorder %v91, 112
  %v410 = vsel %vm409, %v406, %v408
  %v411 = vsel %vm409, %v404, %v406
  %v412 = vsel %vm409, %v402, %v404
  %v413 = vsel %vm409, %v408, %v402
  %v414 = vsel %vm72, 1, 0
  %v415 = vlaneseq
  %v416 = vshrl.u32 %v415, 7
  %v417 = vsub.s32 0, %v416
  %v418 = vrot.slane %v414, %v417
  %v419 = vlaneseq
  %v420 = vshrl.u32 %v419, 7
  %v421 = vsub.s32 1, %v420
  %v422 = vrot.slane %v414, %v421
  %v423 = vlaneseq
  %v424 = vshrl.u32 %v423, 7
  %v425 = vsub.s32 2, %v424
  %v426 = vrot.slane %v414, %v425
  %v427 = vlaneseq
  %v428 = vshrl.u32 %v427, 7
  %v429 = vsub.s32 3, %v428
  %v430 = vrot.slane %v414, %v429
  %vm431 = vcmp.eq.s32.totalorder %v418, 1
  %vm432 = vcmp.eq.s32.totalorder %v422, 1
  %vm433 = vcmp.eq.s32.totalorder %v426, 1
  %vm434 = vcmp.eq.s32.totalorder %v430, 1
  %v435 = vsel %vm431, %v412, 0.0
  %v436 = vsel %vm432, %v411, 0.0
  %v437 = vsel %vm433, %v410, 0.0
  %v438 = vsel %vm434, %v413, 0.0
  %v443 = vrot.slane %v435, 4
  %v444 = vrot.slane %v436, 4
  %v445 = vrot.slane %v437, 4
  %v446 = vrot.slane %v438, 4
  %451 = vst [vmem:[#allocation2 + $0x60] sm:$0xf0] %v443
  %452 = vst [vmem:[#allocation2 + $0x68] sm:$0xf0] %v444
  %453 = vst [vmem:[#allocation2 + $0x70] sm:$0xf0] %v445
  %454 = vst [vmem:[#allocation2 + $0x78] sm:$0xf0] %v446
  %455 = vrot.lane.b32.xlu0 %v74, 111
  %v456 = vpop.permute.xlu0 %455
  %457 = vrot.lane.b32.xlu0 %v78, 111
  %v458 = vpop.permute.xlu0 %457
  %459 = vrot.lane.b32.xlu0 %v75, 111
  %v460 = vpop.permute.xlu0 %459
  %461 = vrot.lane.b32.xlu0 %v79, 111
  %v462 = vpop.permute.xlu0 %461
  %vm463 = vcmp.lt.s32.totalorder %v91, 111
  %v464 = vsel %vm463, %v460, %v462
  %v465 = vsel %vm463, %v458, %v460
  %v466 = vsel %vm463, %v456, %v458
  %v467 = vsel %vm463, %v462, %v456
  %v468 = vsel %vm73, 1, 0
  %v469 = vlaneseq
  %v470 = vshrl.u32 %v469, 7
  %v471 = vsub.s32 0, %v470
  %v472 = vrot.slane %v468, %v471
  %v473 = vlaneseq
  %v474 = vshrl.u32 %v473, 7
  %v475 = vsub.s32 1, %v474
  %v476 = vrot.slane %v468, %v475
  %v477 = vlaneseq
  %v478 = vshrl.u32 %v477, 7
  %v479 = vsub.s32 2, %v478
  %v480 = vrot.slane %v468, %v479
  %v481 = vlaneseq
  %v482 = vshrl.u32 %v481, 7
  %v483 = vsub.s32 3, %v482
  %v484 = vrot.slane %v468, %v483
  %vm485 = vcmp.eq.s32.totalorder %v472, 1
  %vm486 = vcmp.eq.s32.totalorder %v476, 1
  %vm487 = vcmp.eq.s32.totalorder %v480, 1
  %vm488 = vcmp.eq.s32.totalorder %v484, 1
  %v489 = vsel %vm485, %v466, 0.0
  %v490 = vsel %vm486, %v465, 0.0
  %v491 = vsel %vm487, %v464, 0.0
  %v492 = vsel %vm488, %v467, 0.0
  %493 = vst [vmem:[#allocation2 + $0x80] sm:$0xf] %v489
  %494 = vst [vmem:[#allocation2 + $0x88] sm:$0xf] %v490
  %495 = vst [vmem:[#allocation2 + $0x90] sm:$0xf] %v491
  %496 = vst [vmem:[#allocation2 + $0x98] sm:$0xf] %v492
  %v497 = vld [vmem:[#allocation2] sm:$0xff]
  %v498 = vld [vmem:[#allocation2 + $0x8] sm:$0xff]
  %v499 = vld [vmem:[#allocation2 + $0x10] sm:$0xff]
  %v500 = vld [vmem:[#allocation2 + $0x18] sm:$0xff]
  %v501 = vld [vmem:[#allocation2 + $0x20] sm:$0xff]
  %v502 = vld [vmem:[#allocation2 + $0x28] sm:$0xff]
  %v503 = vld [vmem:[#allocation2 + $0x30] sm:$0xff]
  %v504 = vld [vmem:[#allocation2 + $0x38] sm:$0xff]
  %v505 = vld [vmem:[#allocation2 + $0x40] sm:$0xff]
  %v506 = vld [vmem:[#allocation2 + $0x48] sm:$0xff]
  %v507 = vld [vmem:[#allocation2 + $0x50] sm:$0xff]
  %v508 = vld [vmem:[#allocation2 + $0x58] sm:$0xff]
  %v509 = vld [vmem:[#allocation2 + $0x60] sm:$0xff]
  %v510 = vld [vmem:[#allocation2 + $0x68] sm:$0xff]
  %v511 = vld [vmem:[#allocation2 + $0x70] sm:$0xff]
  %v512 = vld [vmem:[#allocation2 + $0x78] sm:$0xff]
  %v513 = vld [vmem:[#allocation2 + $0x80] sm:$0xf]
  %v514 = vld [vmem:[#allocation2 + $0x88] sm:$0xf]
  %v515 = vld [vmem:[#allocation2 + $0x90] sm:$0xf]
  %v516 = vld [vmem:[#allocation2 + $0x98] sm:$0xf]
  %v517 = vld [vmem:[%s4] sm:$0xff]
  %v518 = vld [vmem:[%s5] sm:$0xff]
  %520 = vset.pattern.permute.xlu0 0
  %521 = vperm.xlu0 %520, %v518
  %v522 = vpop.permute.xlu0 %521
  %vm524 = vcmask 293888
  %v526 = vsel %vm524, %v517, 0
  %vm528 = vcmask 1043456
  %v530 = vsel %vm528, %v513, 0
  %v533 = vsel %vm528, %v514, 0
  %v536 = vsel %vm528, %v515, 0
  %v539 = vsel %vm528, %v516, 0
  %541 = vmatprep.subr.mxu0 0.0
  %542 = vmatpush1.msra.mxu0 0.0
  %543 = vmatprep.subr.mxu0 0.0
  %544 = vmatpush1.msra.mxu0 0.0
  %545 = vmatprep.subr.mxu0 0.0
  %546 = vmatpush1.msra.mxu0 0.0
  %547 = vmatprep.subr.mxu0 0.0
  %548 = vmatpush1.msra.mxu0 0.0
  %549 = vmatprep.subr.mxu0 0.0
  %550 = vmatpush1.msra.mxu0 0.0
  %551 = vmatprep.subr.mxu0 0.0
  %552 = vmatpush1.msra.mxu0 0.0
  %553 = vmatprep.subr.mxu0 0.0
  %554 = vmatpush1.msra.mxu0 0.0
  %555 = vmatprep.subr.mxu0 0.0
  %556 = vmatpush1.msra.mxu0 0.0
  %557 = vmatprep.subr.mxu0 0.0
  %558 = vmatpush1.msra.mxu0 0.0
  %559 = vmatprep.subr.mxu0 0.0
  %560 = vmatpush1.msra.mxu0 0.0
  %561 = vmatprep.subr.mxu0 0.0
  %562 = vmatpush1.msra.mxu0 0.0
  %563 = vmatprep.subr.mxu0 %v533
  %564 = vmatpush1.msra.mxu0 %v530
  %565 = vmatprep.subr.mxu0 %v510
  %566 = vmatpush1.msra.mxu0 %v509
  %567 = vmatprep.subr.mxu0 %v506
  %568 = vmatpush1.msra.mxu0 %v505
  %569 = vmatprep.subr.mxu0 %v502
  %570 = vmatpush1.msra.mxu0 %v501
  %571 = vmatprep.subr.mxu0 %v498
  %572 = vmatpush1.msra.mxu0 %v497
  %573 = vmatprep.subr.mxu0 0.0
  %574 = vmatpush2.msra.mxu0 0.0
  %575 = vmatprep.subr.mxu0 0.0
  %576 = vmatpush2.msra.mxu0 0.0
  %577 = vmatprep.subr.mxu0 0.0
  %578 = vmatpush2.msra.mxu0 0.0
  %579 = vmatprep.subr.mxu0 0.0
  %580 = vmatpush2.msra.mxu0 0.0
  %581 = vmatprep.subr.mxu0 0.0
  %582 = vmatpush2.msra.mxu0 0.0
  %583 = vmatprep.subr.mxu0 0.0
  %584 = vmatpush2.msra.mxu0 0.0
  %585 = vmatprep.subr.mxu0 0.0
  %586 = vmatpush2.msra.mxu0 0.0
  %587 = vmatprep.subr.mxu0 0.0
  %588 = vmatpush2.msra.mxu0 0.0
  %589 = vmatprep.subr.mxu0 0.0
  %590 = vmatpush2.msra.mxu0 0.0
  %591 = vmatprep.subr.mxu0 0.0
  %592 = vmatpush2.msra.mxu0 0.0
  %593 = vmatprep.subr.mxu0 0.0
  %594 = vmatpush2.msra.mxu0 0.0
  %595 = vmatprep.subr.mxu0 0.0
  %596 = vmatpush2.msra.mxu0 0.0
  %597 = vmatprep.subr.mxu0 0.0
  %598 = vmatpush2.msra.mxu0 0.0
  %599 = vmatprep.subr.mxu0 0.0
  %600 = vmatpush2.msra.mxu0 0.0
  %601 = vmatprep.subr.mxu0 0.0
  %602 = vmatpush2.msra.mxu0 0.0
  %603 = vmatprep.subr.mxu0 0.0
  %604 = vmatpush2.msra.mxu0 0.0
  %605 = vmatprep.mubr.f32.mxu0 0.0
  %606 = vmatmul.mubr.f32.gmra.mxu0 %v526
  %v607 = vpop.f32.mrf.mxu0
  %v608 = vadd.f32 %v522, %v607
  %v609 = vpop.f32.mrf.mxu0
  %v610 = vadd.f32 %v522, %v609
  %611 = vdwg.mxu0
  %612 = vmatprep.subr.mxu0 0.0
  %613 = vmatpush1.msra.mxu0 0.0
  %614 = vmatprep.subr.mxu0 0.0
  %615 = vmatpush1.msra.mxu0 0.0
  %616 = vmatprep.subr.mxu0 0.0
  %617 = vmatpush1.msra.mxu0 0.0
  %618 = vmatprep.subr.mxu0 0.0
  %619 = vmatpush1.msra.mxu0 0.0
  %620 = vmatprep.subr.mxu0 0.0
  %621 = vmatpush1.msra.mxu0 0.0
  %622 = vmatprep.subr.mxu0 0.0
  %623 = vmatpush1.msra.mxu0 0.0
  %624 = vmatprep.subr.mxu0 0.0
  %625 = vmatpush1.msra.mxu0 0.0
  %626 = vmatprep.subr.mxu0 0.0
  %627 = vmatpush1.msra.mxu0 0.0
  %628 = vmatprep.subr.mxu0 0.0
  %629 = vmatpush1.msra.mxu0 0.0
  %630 = vmatprep.subr.mxu0 0.0
  %631 = vmatpush1.msra.mxu0 0.0
  %632 = vmatprep.subr.mxu0 0.0
  %633 = vmatpush1.msra.mxu0 0.0
  %634 = vmatprep.subr.mxu0 %v539
  %635 = vmatpush1.msra.mxu0 %v536
  %636 = vmatprep.subr.mxu0 %v512
  %637 = vmatpush1.msra.mxu0 %v511
  %638 = vmatprep.subr.mxu0 %v508
  %639 = vmatpush1.msra.mxu0 %v507
  %640 = vmatprep.subr.mxu0 %v504
  %641 = vmatpush1.msra.mxu0 %v503
  %642 = vmatprep.subr.mxu0 %v500
  %643 = vmatpush1.msra.mxu0 %v499
  %644 = vmatprep.subr.mxu0 0.0
  %645 = vmatpush2.msra.mxu0 0.0
  %646 = vmatprep.subr.mxu0 0.0
  %647 = vmatpush2.msra.mxu0 0.0
  %648 = vmatprep.subr.mxu0 0.0
  %649 = vmatpush2.msra.mxu0 0.0
  %650 = vmatprep.subr.mxu0 0.0
  %651 = vmatpush2.msra.mxu0 0.0
  %652 = vmatprep.subr.mxu0 0.0
  %653 = vmatpush2.msra.mxu0 0.0
  %654 = vmatprep.subr.mxu0 0.0
  %655 = vmatpush2.msra.mxu0 0.0
  %656 = vmatprep.subr.mxu0 0.0
  %657 = vmatpush2.msra.mxu0 0.0
  %658 = vmatprep.subr.mxu0 0.0
  %659 = vmatpush2.msra.mxu0 0.0
  %660 = vmatprep.subr.mxu0 0.0
  %661 = vmatpush2.msra.mxu0 0.0
  %662 = vmatprep.subr.mxu0 0.0
  %663 = vmatpush2.msra.mxu0 0.0
  %664 = vmatprep.subr.mxu0 0.0
  %665 = vmatpush2.msra.mxu0 0.0
  %666 = vmatprep.subr.mxu0 0.0
  %667 = vmatpush2.msra.mxu0 0.0
  %668 = vmatprep.subr.mxu0 0.0
  %669 = vmatpush2.msra.mxu0 0.0
  %670 = vmatprep.subr.mxu0 0.0
  %671 = vmatpush2.msra.mxu0 0.0
  %672 = vmatprep.subr.mxu0 0.0
  %673 = vmatpush2.msra.mxu0 0.0
  %674 = vmatprep.subr.mxu0 0.0
  %675 = vmatpush2.msra.mxu0 0.0
  %676 = vmatprep.mubr.f32.mxu0 0.0
  %677 = vmatmul.mubr.f32.gmra.mxu0 %v526
  %v678 = vpop.f32.mrf.mxu0
  %v679 = vadd.f32 %v522, %v678
  %v680 = vpop.f32.mrf.mxu0
  %v681 = vadd.f32 %v522, %v680
  %682 = vdwg.mxu0
  %v683 = vmax.f32 %v608, 0.0
  %v684 = vmax.f32 %v610, 0.0
  %v685 = vmax.f32 %v679, 0.0
  %v686 = vmax.f32 %v681, 0.0
  %v687 = vadd.f32 %v683, %v684
  %v688 = vadd.f32 %v687, %v685
  %v689 = vadd.f32 %v688, %v686
  %690 = vadd.xlane.f32.xlu0 %v689
  %v691 = vpop.xlane.xlu0 %690
  %v692 = vrcp.pop 512.0
  %v693 = vmul.f32 %v691, %v692
  %v694 = vsub.f32 %v683, %v693
  %v695 = vsub.f32 %v684, %v693
  %v696 = vsub.f32 %v685, %v693
  %v697 = vsub.f32 %v686, %v693
  %v698 = vmul.f32 %v694, %v694
  %v699 = vmul.f32 %v695, %v695
  %v700 = vmul.f32 %v696, %v696
  %v701 = vmul.f32 %v697, %v697
  %v702 = vadd.f32 %v698, %v699
  %v703 = vadd.f32 %v702, %v700
  %v704 = vadd.f32 %v703, %v701
  %705 = vadd.xlane.f32.xlu0 %v704
  %v706 = vpop.xlane.xlu0 %705
  %v707 = vmul.f32 %v706, %v692
  %v708 = vld [vmem:[%s6] sm:$0xff]
  %v709 = vadd.f32 %v707, 1e-05
  %v710 = vrsqrt.pop %v709
  %v711 = vmul.f32 %v708, %v710
  %713 = vset.pattern.permute.xlu0 0
  %714 = vperm.xlu0 %713, %v711
  %v715 = vpop.permute.xlu0 %714
  %v717 = vmul.f32 %v694, %v715
  %v718 = vmul.f32 %v695, %v715
  %v719 = vmul.f32 %v696, %v715
  %v720 = vmul.f32 %v697, %v715
  %v721 = vld [vmem:[%s7] sm:$0xff]
  %723 = vset.pattern.permute.xlu0 0
  %724 = vperm.xlu0 %723, %v721
  %v725 = vpop.permute.xlu0 %724
  %v727 = vadd.f32 %v717, %v725
  %v728 = vadd.f32 %v718, %v725
  %v729 = vadd.f32 %v719, %v725
  %v730 = vadd.f32 %v720, %v725
  %731 = vrot.lane.b32.xlu0 %v727, 17
  %v732 = vpop.permute.xlu0 %731
  %733 = vrot.lane.b32.xlu0 %v728, 17
  %v734 = vpop.permute.xlu0 %733
  %735 = vrot.lane.b32.xlu0 %v729, 17
  %v736 = vpop.permute.xlu0 %735
  %737 = vrot.lane.b32.xlu0 %v730, 17
  %v738 = vpop.permute.xlu0 %737
  %v739 = vsel %vm92, %v736, %v738
  %v740 = vsel %vm92, %v734, %v736
  %v741 = vsel %vm92, %v732, %v734
  %v742 = vsel %vm92, %v738, %v732
  %v743 = vsel %vm114, %v742, 0.0
  %v744 = vsel %vm115, %v741, 0.0
  %v745 = vsel %vm116, %v740, 0.0
  %v746 = vsel %vm117, %v739, 0.0
  %747 = vst [vmem:[#allocation3] sm:$0xff] %v743
  %748 = vst [vmem:[#allocation3 + $0x8] sm:$0xff] %v744
  %749 = vst [vmem:[#allocation3 + $0x10] sm:$0xff] %v745
  %750 = vst [vmem:[#allocation3 + $0x18] sm:$0xff] %v746
  %751 = vrot.lane.b32.xlu0 %v727, 16
  %v752 = vpop.permute.xlu0 %751
  %753 = vrot.lane.b32.xlu0 %v728, 16
  %v754 = vpop.permute.xlu0 %753
  %755 = vrot.lane.b32.xlu0 %v729, 16
  %v756 = vpop.permute.xlu0 %755
  %757 = vrot.lane.b32.xlu0 %v730, 16
  %v758 = vpop.permute.xlu0 %757
  %v759 = vsel %vm134, %v756, %v758
  %v760 = vsel %vm134, %v754, %v756
  %v761 = vsel %vm134, %v752, %v754
  %v762 = vsel %vm134, %v758, %v752
  %v763 = vsel %vm156, %v762, 0.0
  %v764 = vsel %vm157, %v761, 0.0
  %v765 = vsel %vm158, %v760, 0.0
  %v766 = vsel %vm159, %v759, 0.0
  %767 = vst [vmem:[#allocation3 + $0x20] sm:$0xff] %v763
  %768 = vst [vmem:[#allocation3 + $0x28] sm:$0xff] %v764
  %769 = vst [vmem:[#allocation3 + $0x30] sm:$0xff] %v765
  %770 = vst [vmem:[#allocation3 + $0x38] sm:$0xff] %v766
  %771 = vrot.lane.b32.xlu0 %v727, 15
  %v772 = vpop.permute.xlu0 %771
  %773 = vrot.lane.b32.xlu0 %v728, 15
  %v774 = vpop.permute.xlu0 %773
  %775 = vrot.lane.b32.xlu0 %v729, 15
  %v776 = vpop.permute.xlu0 %775
  %777 = vrot.lane.b32.xlu0 %v730, 15
  %v778 = vpop.permute.xlu0 %777
  %v779 = vsel %vm188, %v776, %v778
  %v780 = vsel %vm188, %v774, %v776
  %v781 = vsel %vm188, %v772, %v774
  %v782 = vsel %vm188, %v778, %v772
  %v783 = vsel %vm210, %v782, 0.0
  %v784 = vsel %vm211, %v781, 0.0
  %v785 = vsel %vm212, %v780, 0.0
  %v786 = vsel %vm213, %v779, 0.0
  %787 = vst [vmem:[#allocation3 + $0x40] sm:$0xff] %v783
  %788 = vst [vmem:[#allocation3 + $0x48] sm:$0xff] %v784
  %789 = vst [vmem:[#allocation3 + $0x50] sm:$0xff] %v785
  %790 = vst [vmem:[#allocation3 + $0x58] sm:$0xff] %v786
  %791 = vrot.lane.b32.xlu0 %v727, 1
  %v792 = vpop.permute.xlu0 %791
  %793 = vrot.lane.b32.xlu0 %v728, 1
  %v794 = vpop.permute.xlu0 %793
  %795 = vrot.lane.b32.xlu0 %v729, 1
  %v796 = vpop.permute.xlu0 %795
  %797 = vrot.lane.b32.xlu0 %v730, 1
  %v798 = vpop.permute.xlu0 %797
  %v799 = vsel %vm230, %v796, %v798
  %v800 = vsel %vm230, %v794, %v796
  %v801 = vsel %vm230, %v792, %v794
  %v802 = vsel %vm230, %v798, %v792
  %v803 = vsel %vm252, %v802, 0.0
  %v804 = vsel %vm253, %v801, 0.0
  %v805 = vsel %vm254, %v800, 0.0
  %v806 = vsel %vm255, %v799, 0.0
  %807 = vst [vmem:[#allocation3 + $0x60] sm:$0xff] %v803
  %808 = vst [vmem:[#allocation3 + $0x68] sm:$0xff] %v804
  %809 = vst [vmem:[#allocation3 + $0x70] sm:$0xff] %v805
  %810 = vst [vmem:[#allocation3 + $0x78] sm:$0xff] %v806
  %v811 = vsel %vm293, %v727, 0.0
  %v812 = vsel %vm294, %v728, 0.0
  %v813 = vsel %vm295, %v729, 0.0
  %v814 = vsel %vm296, %v730, 0.0
  %815 = vst [vmem:[#allocation3 + $0x80] sm:$0xff] %v811
  %816 = vst [vmem:[#allocation3 + $0x88] sm:$0xff] %v812
  %817 = vst [vmem:[#allocation3 + $0x90] sm:$0xff] %v813
  %818 = vst [vmem:[#allocation3 + $0x98] sm:$0xff] %v814
  %819 = vrot.lane.b32.xlu0 %v727, 127
  %v820 = vpop.permute.xlu0 %819
  %821 = vrot.lane.b32.xlu0 %v728, 127
  %v822 = vpop.permute.xlu0 %821
  %823 = vrot.lane.b32.xlu0 %v729, 127
  %v824 = vpop.permute.xlu0 %823
  %825 = vrot.lane.b32.xlu0 %v730, 127
  %v826 = vpop.permute.xlu0 %825
  %v827 = vsel %vm313, %v824, %v826
  %v828 = vsel %vm313, %v822, %v824
  %v829 = vsel %vm313, %v820, %v822
  %v830 = vsel %vm313, %v826, %v820
  %v831 = vsel %vm335, %v829, 0.0
  %v832 = vsel %vm336, %v828, 0.0
  %v833 = vsel %vm337, %v827, 0.0
  %v834 = vsel %vm338, %v830, 0.0
  %835 = vst [vmem:[#allocation3 + $0xa0] sm:$0xff] %v831
  %836 = vst [vmem:[#allocation3 + $0xa8] sm:$0xff] %v832
  %837 = vst [vmem:[#allocation3 + $0xb0] sm:$0xff] %v833
  %838 = vst [vmem:[#allocation3 + $0xb8] sm:$0xff] %v834
  %839 = vrot.lane.b32.xlu0 %v727, 113
  %v840 = vpop.permute.xlu0 %839
  %841 = vrot.lane.b32.xlu0 %v728, 113
  %v842 = vpop.permute.xlu0 %841
  %843 = vrot.lane.b32.xlu0 %v729, 113
  %v844 = vpop.permute.xlu0 %843
  %845 = vrot.lane.b32.xlu0 %v730, 113
  %v846 = vpop.permute.xlu0 %845
  %v847 = vsel %vm367, %v844, %v846
  %v848 = vsel %vm367, %v842, %v844
  %v849 = vsel %vm367, %v840, %v842
  %v850 = vsel %vm367, %v846, %v840
  %v851 = vsel %vm389, %v849, 0.0
  %v852 = vsel %vm390, %v848, 0.0
  %v853 = vsel %vm391, %v847, 0.0
  %v854 = vsel %vm392, %v850, 0.0
  %855 = vst [vmem:[#allocation3 + $0xc0] sm:$0xff] %v851
  %856 = vst [vmem:[#allocation3 + $0xc8] sm:$0xff] %v852
  %857 = vst [vmem:[#allocation3 + $0xd0] sm:$0xff] %v853
  %858 = vst [vmem:[#allocation3 + $0xd8] sm:$0xff] %v854
  %859 = vrot.lane.b32.xlu0 %v727, 112
  %v860 = vpop.permute.xlu0 %859
  %861 = vrot.lane.b32.xlu0 %v728, 112
  %v862 = vpop.permute.xlu0 %861
  %863 = vrot.lane.b32.xlu0 %v729, 112
  %v864 = vpop.permute.xlu0 %863
  %865 = vrot.lane.b32.xlu0 %v730, 112
  %v866 = vpop.permute.xlu0 %865
  %v867 = vsel %vm409, %v864, %v866
  %v868 = vsel %vm409, %v862, %v864
  %v869 = vsel %vm409, %v860, %v862
  %v870 = vsel %vm409, %v866, %v860
  %v871 = vsel %vm431, %v869, 0.0
  %v872 = vsel %vm432, %v868, 0.0
  %v873 = vsel %vm433, %v867, 0.0
  %v874 = vsel %vm434, %v870, 0.0
  %875 = vst [vmem:[#allocation3 + $0xe0] sm:$0xff] %v871
  %876 = vst [vmem:[#allocation3 + $0xe8] sm:$0xff] %v872
  %877 = vst [vmem:[#allocation3 + $0xf0] sm:$0xff] %v873
  %878 = vst [vmem:[#allocation3 + $0xf8] sm:$0xff] %v874
  %879 = vrot.lane.b32.xlu0 %v727, 111
  %v880 = vpop.permute.xlu0 %879
  %881 = vrot.lane.b32.xlu0 %v728, 111
  %v882 = vpop.permute.xlu0 %881
  %883 = vrot.lane.b32.xlu0 %v729, 111
  %v884 = vpop.permute.xlu0 %883
  %885 = vrot.lane.b32.xlu0 %v730, 111
  %v886 = vpop.permute.xlu0 %885
  %v887 = vsel %vm463, %v884, %v886
  %v888 = vsel %vm463, %v882, %v884
  %v889 = vsel %vm463, %v880, %v882
  %v890 = vsel %vm463, %v886, %v880
  %v891 = vsel %vm485, %v889, 0.0
  %v892 = vsel %vm486, %v888, 0.0
  %v893 = vsel %vm487, %v887, 0.0
  %v894 = vsel %vm488, %v890, 0.0
  %895 = vst [vmem:[#allocation3 + $0x100] sm:$0xff] %v891
  %896 = vst [vmem:[#allocation3 + $0x108] sm:$0xff] %v892
  %897 = vst [vmem:[#allocation3 + $0x110] sm:$0xff] %v893
  %898 = vst [vmem:[#allocation3 + $0x118] sm:$0xff] %v894
  %v899 = vld [vmem:[#allocation3] sm:$0xff]
  %v900 = vld [vmem:[#allocation3 + $0x8] sm:$0xff]
  %v901 = vld [vmem:[#allocation3 + $0x10] sm:$0xff]
  %v902 = vld [vmem:[#allocation3 + $0x18] sm:$0xff]
  %v903 = vld [vmem:[#allocation3 + $0x20] sm:$0xff]
  %v904 = vld [vmem:[#allocation3 + $0x28] sm:$0xff]
  %v905 = vld [vmem:[#allocation3 + $0x30] sm:$0xff]
  %v906 = vld [vmem:[#allocation3 + $0x38] sm:$0xff]
  %v907 = vld [vmem:[#allocation3 + $0x40] sm:$0xff]
  %v908 = vld [vmem:[#allocation3 + $0x48] sm:$0xff]
  %v909 = vld [vmem:[#allocation3 + $0x50] sm:$0xff]
  %v910 = vld [vmem:[#allocation3 + $0x58] sm:$0xff]
  %v911 = vld [vmem:[#allocation3 + $0x60] sm:$0xff]
  %v912 = vld [vmem:[#allocation3 + $0x68] sm:$0xff]
  %v913 = vld [vmem:[#allocation3 + $0x70] sm:$0xff]
  %v914 = vld [vmem:[#allocation3 + $0x78] sm:$0xff]
  %v915 = vld [vmem:[#allocation3 + $0x80] sm:$0xff]
  %v916 = vld [vmem:[#allocation3 + $0x88] sm:$0xff]
  %v917 = vld [vmem:[#allocation3 + $0x90] sm:$0xff]
  %v918 = vld [vmem:[#allocation3 + $0x98] sm:$0xff]
  %v919 = vld [vmem:[#allocation3 + $0xa0] sm:$0xff]
  %v920 = vld [vmem:[#allocation3 + $0xa8] sm:$0xff]
  %v921 = vld [vmem:[#allocation3 + $0xb0] sm:$0xff]
  %v922 = vld [vmem:[#allocation3 + $0xb8] sm:$0xff]
  %v923 = vld [vmem:[#allocation3 + $0xc0] sm:$0xff]
  %v924 = vld [vmem:[#allocation3 + $0xc8] sm:$0xff]
  %v925 = vld [vmem:[#allocation3 + $0xd0] sm:$0xff]
  %v926 = vld [vmem:[#allocation3 + $0xd8] sm:$0xff]
  %v927 = vld [vmem:[#allocation3 + $0xe0] sm:$0xff]
  %v928 = vld [vmem:[#allocation3 + $0xe8] sm:$0xff]
  %v929 = vld [vmem:[#allocation3 + $0xf0] sm:$0xff]
  %v930 = vld [vmem:[#allocation3 + $0xf8] sm:$0xff]
  %v931 = vld [vmem:[#allocation3 + $0x100] sm:$0xff]
  %v932 = vld [vmem:[#allocation3 + $0x108] sm:$0xff]
  %v933 = vld [vmem:[#allocation3 + $0x110] sm:$0xff]
  %v934 = vld [vmem:[#allocation3 + $0x118] sm:$0xff]
  %v935 = vld [vmem:[%s8] sm:$0xff]
  %v936 = vld [vmem:[%s9] sm:$0xff]
  %938 = vset.pattern.permute.xlu0 0
  %939 = vperm.xlu0 %938, %v936
  %v940 = vpop.permute.xlu0 %939
  %vm942 = vcmask 588800
  %v944 = vsel %vm942, %v935, 0
  %946 = vmatprep.subr.mxu0 0.0
  %947 = vmatpush1.msra.mxu0 0.0
  %948 = vmatprep.subr.mxu0 0.0
  %949 = vmatpush1.msra.mxu0 0.0
  %950 = vmatprep.subr.mxu0 0.0
  %951 = vmatpush1.msra.mxu0 0.0
  %952 = vmatprep.subr.mxu0 0.0
  %953 = vmatpush1.msra.mxu0 0.0
  %954 = vmatprep.subr.mxu0 0.0
  %955 = vmatpush1.msra.mxu0 0.0
  %956 = vmatprep.subr.mxu0 0.0
  %957 = vmatpush1.msra.mxu0 0.0
  %958 = vmatprep.subr.mxu0 0.0
  %959 = vmatpush1.msra.mxu0 0.0
  %960 = vmatprep.subr.mxu0 %v932
  %961 = vmatpush1.msra.mxu0 %v931
  %962 = vmatprep.subr.mxu0 %v928
  %963 = vmatpush1.msra.mxu0 %v927
  %964 = vmatprep.subr.mxu0 %v924
  %965 = vmatpush1.msra.mxu0 %v923
  %966 = vmatprep.subr.mxu0 %v920
  %967 = vmatpush1.msra.mxu0 %v919
  %968 = vmatprep.subr.mxu0 %v916
  %969 = vmatpush1.msra.mxu0 %v915
  %970 = vmatprep.subr.mxu0 %v912
  %971 = vmatpush1.msra.mxu0 %v911
  %972 = vmatprep.subr.mxu0 %v908
  %973 = vmatpush1.msra.mxu0 %v907
  %974 = vmatprep.subr.mxu0 %v904
  %975 = vmatpush1.msra.mxu0 %v903
  %976 = vmatprep.subr.mxu0 %v900
  %977 = vmatpush1.msra.mxu0 %v899
  %978 = vmatprep.subr.mxu0 0.0
  %979 = vmatpush2.msra.mxu0 0.0
  %980 = vmatprep.subr.mxu0 0.0
  %981 = vmatpush2.msra.mxu0 0.0
  %982 = vmatprep.subr.mxu0 0.0
  %983 = vmatpush2.msra.mxu0 0.0
  %984 = vmatprep.subr.mxu0 0.0
  %985 = vmatpush2.msra.mxu0 0.0
  %986 = vmatprep.subr.mxu0 0.0
  %987 = vmatpush2.msra.mxu0 0.0
  %988 = vmatprep.subr.mxu0 0.0
  %989 = vmatpush2.msra.mxu0 0.0
  %990 = vmatprep.subr.mxu0 0.0
  %991 = vmatpush2.msra.mxu0 0.0
  %992 = vmatprep.subr.mxu0 0.0
  %993 = vmatpush2.msra.mxu0 0.0
  %994 = vmatprep.subr.mxu0 0.0
  %995 = vmatpush2.msra.mxu0 0.0
  %996 = vmatprep.subr.mxu0 0.0
  %997 = vmatpush2.msra.mxu0 0.0
  %998 = vmatprep.subr.mxu0 0.0
  %999 = vmatpush2.msra.mxu0 0.0
  %1000 = vmatprep.subr.mxu0 0.0
  %1001 = vmatpush2.msra.mxu0 0.0
  %1002 = vmatprep.subr.mxu0 0.0
  %1003 = vmatpush2.msra.mxu0 0.0
  %1004 = vmatprep.subr.mxu0 0.0
  %1005 = vmatpush2.msra.mxu0 0.0
  %1006 = vmatprep.subr.mxu0 0.0
  %1007 = vmatpush2.msra.mxu0 0.0
  %1008 = vmatprep.subr.mxu0 0.0
  %1009 = vmatpush2.msra.mxu0 0.0
  %1010 = vmatprep.mubr.f32.mxu0 0.0
  %1011 = vmatmul.mubr.f32.gmra.mxu0 %v944
  %v1012 = vpop.f32.mrf.mxu0
  %v1013 = vadd.f32 %v940, %v1012
  %v1014 = vpop.f32.mrf.mxu0
  %v1015 = vadd.f32 %v940, %v1014
  %1016 = vdwg.mxu0
  %1017 = vmatprep.subr.mxu0 0.0
  %1018 = vmatpush1.msra.mxu0 0.0
  %1019 = vmatprep.subr.mxu0 0.0
  %1020 = vmatpush1.msra.mxu0 0.0
  %1021 = vmatprep.subr.mxu0 0.0
  %1022 = vmatpush1.msra.mxu0 0.0
  %1023 = vmatprep.subr.mxu0 0.0
  %1024 = vmatpush1.msra.mxu0 0.0
  %1025 = vmatprep.subr.mxu0 0.0
  %1026 = vmatpush1.msra.mxu0 0.0
  %1027 = vmatprep.subr.mxu0 0.0
  %1028 = vmatpush1.msra.mxu0 0.0
  %1029 = vmatprep.subr.mxu0 0.0
  %1030 = vmatpush1.msra.mxu0 0.0
  %1031 = vmatprep.subr.mxu0 %v934
  %1032 = vmatpush1.msra.mxu0 %v933
  %1033 = vmatprep.subr.mxu0 %v930
  %1034 = vmatpush1.msra.mxu0 %v929
  %1035 = vmatprep.subr.mxu0 %v926
  %1036 = vmatpush1.msra.mxu0 %v925
  %1037 = vmatprep.subr.mxu0 %v922
  %1038 = vmatpush1.msra.mxu0 %v921
  %1039 = vmatprep.subr.mxu0 %v918
  %1040 = vmatpush1.msra.mxu0 %v917
  %1041 = vmatprep.subr.mxu0 %v914
  %1042 = vmatpush1.msra.mxu0 %v913
  %1043 = vmatprep.subr.mxu0 %v910
  %1044 = vmatpush1.msra.mxu0 %v909
  %1045 = vmatprep.subr.mxu0 %v906
  %1046 = vmatpush1.msra.mxu0 %v905
  %1047 = vmatprep.subr.mxu0 %v902
  %1048 = vmatpush1.msra.mxu0 %v901
  %1049 = vmatprep.subr.mxu0 0.0
  %1050 = vmatpush2.msra.mxu0 0.0
  %1051 = vmatprep.subr.mxu0 0.0
  %1052 = vmatpush2.msra.mxu0 0.0
  %1053 = vmatprep.subr.mxu0 0.0
  %1054 = vmatpush2.msra.mxu0 0.0
  %1055 = vmatprep.subr.mxu0 0.0
  %1056 = vmatpush2.msra.mxu0 0.0
  %1057 = vmatprep.subr.mxu0 0.0
  %1058 = vmatpush2.msra.mxu0 0.0
  %1059 = vmatprep.subr.mxu0 0.0
  %1060 = vmatpush2.msra.mxu0 0.0
  %1061 = vmatprep.subr.mxu0 0.0
  %1062 = vmatpush2.msra.mxu0 0.0
  %1063 = vmatprep.subr.mxu0 0.0
  %1064 = vmatpush2.msra.mxu0 0.0
  %1065 = vmatprep.subr.mxu0 0.0
  %1066 = vmatpush2.msra.mxu0 0.0
  %1067 = vmatprep.subr.mxu0 0.0
  %1068 = vmatpush2.msra.mxu0 0.0
  %1069 = vmatprep.subr.mxu0 0.0
  %1070 = vmatpush2.msra.mxu0 0.0
  %1071 = vmatprep.subr.mxu0 0.0
  %1072 = vmatpush2.msra.mxu0 0.0
  %1073 = vmatprep.subr.mxu0 0.0
  %1074 = vmatpush2.msra.mxu0 0.0
  %1075 = vmatprep.subr.mxu0 0.0
  %1076 = vmatpush2.msra.mxu0 0.0
  %1077 = vmatprep.subr.mxu0 0.0
  %1078 = vmatpush2.msra.mxu0 0.0
  %1079 = vmatprep.subr.mxu0 0.0
  %1080 = vmatpush2.msra.mxu0 0.0
  %1081 = vmatprep.mubr.f32.mxu0 0.0
  %1082 = vmatmul.mubr.f32.gmra.mxu0 %v944
  %v1083 = vpop.f32.mrf.mxu0
  %v1084 = vadd.f32 %v940, %v1083
  %v1085 = vpop.f32.mrf.mxu0
  %v1086 = vadd.f32 %v940, %v1085
  %1087 = vdwg.mxu0
  %v1088 = vmax.f32 %v1013, 0.0
  %v1089 = vmax.f32 %v1015, 0.0
  %v1090 = vmax.f32 %v1084, 0.0
  %v1091 = vmax.f32 %v1086, 0.0
  %v1092 = vadd.f32 %v1088, %v1089
  %v1093 = vadd.f32 %v1092, %v1090
  %v1094 = vadd.f32 %v1093, %v1091
  %1095 = vadd.xlane.f32.xlu0 %v1094
  %v1096 = vpop.xlane.xlu0 %1095
  %v1097 = vmul.f32 %v1096, %v692
  %v1098 = vsub.f32 %v1088, %v1097
  %v1099 = vsub.f32 %v1089, %v1097
  %v1100 = vsub.f32 %v1090, %v1097
  %v1101 = vsub.f32 %v1091, %v1097
  %v1102 = vmul.f32 %v1098, %v1098
  %v1103 = vmul.f32 %v1099, %v1099
  %v1104 = vmul.f32 %v1100, %v1100
  %v1105 = vmul.f32 %v1101, %v1101
  %v1106 = vadd.f32 %v1102, %v1103
  %v1107 = vadd.f32 %v1106, %v1104
  %v1108 = vadd.f32 %v1107, %v1105
  %1109 = vadd.xlane.f32.xlu0 %v1108
  %v1110 = vpop.xlane.xlu0 %1109
  %v1111 = vmul.f32 %v1110, %v692
  %v1112 = vld [vmem:[%s10] sm:$0xff]
  %v1113 = vadd.f32 %v1111, 1e-05
  %v1114 = vrsqrt.pop %v1113
  %v1115 = vmul.f32 %v1112, %v1114
  %1117 = vset.pattern.permute.xlu0 0
  %1118 = vperm.xlu0 %1117, %v1115
  %v1119 = vpop.permute.xlu0 %1118
  %v1121 = vmul.f32 %v1098, %v1119
  %v1122 = vmul.f32 %v1099, %v1119
  %v1123 = vmul.f32 %v1100, %v1119
  %v1124 = vmul.f32 %v1101, %v1119
  %v1125 = vld [vmem:[%s11] sm:$0xff]
  %1127 = vset.pattern.permute.xlu0 0
  %1128 = vperm.xlu0 %1127, %v1125
  %v1129 = vpop.permute.xlu0 %1128
  %v1131 = vadd.f32 %v1121, %v1129
  %v1132 = vadd.f32 %v1122, %v1129
  %v1133 = vadd.f32 %v1123, %v1129
  %v1134 = vadd.f32 %v1124, %v1129
  %1135 = vrot.lane.b32.xlu0 %v1131, 127
  %v1136 = vpop.permute.xlu0 %1135
  %1137 = vrot.lane.b32.xlu0 %v1132, 127
  %v1138 = vpop.permute.xlu0 %1137
  %1139 = vrot.lane.b32.xlu0 %v1133, 127
  %v1140 = vpop.permute.xlu0 %1139
  %1141 = vrot.lane.b32.xlu0 %v1134, 127
  %v1142 = vpop.permute.xlu0 %1141
  %v1143 = vsel %vm313, %v1140, %v1142
  %v1144 = vsel %vm313, %v1138, %v1140
  %v1145 = vsel %vm313, %v1136, %v1138
  %v1146 = vsel %vm313, %v1142, %v1136
  %v1147 = vmax.f32 %v1131, %v1145
  %v1148 = vmax.f32 %v1132, %v1144
  %v1149 = vmax.f32 %v1133, %v1143
  %v1150 = vmax.f32 %v1134, %v1146
  %1151 = vrot.lane.b32.xlu0 %v1147, 112
  %v1152 = vpop.permute.xlu0 %1151
  %1153 = vrot.lane.b32.xlu0 %v1148, 112
  %v1154 = vpop.permute.xlu0 %1153
  %1155 = vrot.lane.b32.xlu0 %v1149, 112
  %v1156 = vpop.permute.xlu0 %1155
  %1157 = vrot.lane.b32.xlu0 %v1150, 112
  %v1158 = vpop.permute.xlu0 %1157
  %v1159 = vsel %vm409, %v1156, %v1158
  %v1160 = vsel %vm409, %v1154, %v1156
  %v1161 = vsel %vm409, %v1152, %v1154
  %v1162 = vsel %vm409, %v1158, %v1152
  %v1163 = vmax.f32 %v1147, %v1161
  %v1164 = vmax.f32 %v1148, %v1160
  %v1165 = vmax.f32 %v1149, %v1159
  %v1166 = vmax.f32 %v1150, %v1162
  %v1167 = vlaneseq
  %v1168 = vshrl.u32 %v1167, 7
  %v1169 = vadd.s32 %v1168, 8
  %v1170 = vadd.s32 %v1168, 16
  %v1171 = vadd.s32 %v1168, 24
  %v1172 = vadd.s32 %v1168, 32
  %v1173 = vadd.s32 %v1168, 40
  %v1174 = vadd.s32 %v1168, 48
  %v1175 = vadd.s32 %v1168, 56
  %v1176 = vadd.s32 %v1168, 64
  %v1177 = vadd.s32 %v1168, 72
  %v1178 = vadd.s32 %v1168, 80
  %v1179 = vadd.s32 %v1168, 88
  %v1180 = vadd.s32 %v1168, 96
  %v1181 = vadd.s32 %v1168, 104
  %v1182 = vadd.s32 %v1168, 112
  %v1183 = vadd.s32 %v1168, 120
  %v1184 = vadd.s32 %v1168, 128
  %v1185 = vadd.s32 %v1168, 136
  %v1186 = vadd.s32 %v1168, 144
  %v1187 = vadd.s32 %v1168, 152
  %v1188 = vadd.s32 %v1168, 160
  %v1189 = vadd.s32 %v1168, 168
  %v1190 = vadd.s32 %v1168, 176
  %v1191 = vadd.s32 %v1168, 184
  %v1192 = vadd.s32 %v1168, 192
  %v1193 = vadd.s32 %v1168, 200
  %v1194 = vadd.s32 %v1168, 208
  %v1195 = vadd.s32 %v1168, 216
  %v1196 = vadd.s32 %v1168, 224
  %v1197 = vadd.s32 %v1168, 232
  %v1198 = vadd.s32 %v1168, 240
  %v1199 = vadd.s32 %v1168, 248
  %v1200 = vadd.s32 %v1168, 256
  %v1201 = vadd.s32 %v1168, 264
  %v1202 = vadd.s32 %v1168, 272
  %v1203 = vadd.s32 %v1168, 280
  %v1204 = vadd.s32 %v1168, 288
  %v1205 = vadd.s32 %v1168, 296
  %v1206 = vadd.s32 %v1168, 304
  %v1207 = vadd.s32 %v1168, 312
  %v1208 = vadd.s32 %v1168, 320
  %v1209 = vadd.s32 %v1168, 328
  %v1210 = vadd.s32 %v1168, 336
  %v1211 = vadd.s32 %v1168, 344
  %v1212 = vadd.s32 %v1168, 352
  %v1213 = vadd.s32 %v1168, 360
  %v1214 = vadd.s32 %v1168, 368
  %v1215 = vadd.s32 %v1168, 376
  %v1216 = vadd.s32 %v1168, 384
  %v1217 = vadd.s32 %v1168, 392
  %v1218 = vadd.s32 %v1168, 400
  %v1219 = vadd.s32 %v1168, 408
  %v1220 = vadd.s32 %v1168, 416
  %v1221 = vadd.s32 %v1168, 424
  %v1222 = vadd.s32 %v1168, 432
  %v1223 = vadd.s32 %v1168, 440
  %v1224 = vadd.s32 %v1168, 448
  %v1225 = vadd.s32 %v1168, 456
  %v1226 = vadd.s32 %v1168, 464
  %v1227 = vadd.s32 %v1168, 472
  %v1228 = vadd.s32 %v1168, 480
  %v1229 = vadd.s32 %v1168, 488
  %v1230 = vadd.s32 %v1168, 496
  %v1231 = vadd.s32 %v1168, 504
  %v1232 = vld [vmem:[%s3] sm:$0x1]
  %v1233 = vlaneseq
  %v1234 = vshrl.u32 %v1233, 7
  %v1235 = vsub.s32 0, %v1234
  %v1236 = vrot.slane %v1232, %v1235
  %vm1237 = vcmp.eq.s32.totalorder %v1168, %v1236
  %vm1238 = vcmp.eq.s32.totalorder %v1169, %v1236
  %vm1239 = vcmp.eq.s32.totalorder %v1170, %v1236
  %vm1240 = vcmp.eq.s32.totalorder %v1171, %v1236
  %vm1241 = vcmp.eq.s32.totalorder %v1172, %v1236
  %vm1242 = vcmp.eq.s32.totalorder %v1173, %v1236
  %vm1243 = vcmp.eq.s32.totalorder %v1174, %v1236
  %vm1244 = vcmp.eq.s32.totalorder %v1175, %v1236
  %vm1245 = vcmp.eq.s32.totalorder %v1176, %v1236
  %vm1246 = vcmp.eq.s32.totalorder %v1177, %v1236
  %vm1247 = vcmp.eq.s32.totalorder %v1178, %v1236
  %vm1248 = vcmp.eq.s32.totalorder %v1179, %v1236
  %vm1249 = vcmp.eq.s32.totalorder %v1180, %v1236
  %vm1250 = vcmp.eq.s32.totalorder %v1181, %v1236
  %vm1251 = vcmp.eq.s32.totalorder %v1182, %v1236
  %vm1252 = vcmp.eq.s32.totalorder %v1183, %v1236
  %vm1253 = vcmp.eq.s32.totalorder %v1184, %v1236
  %vm1254 = vcmp.eq.s32.totalorder %v1185, %v1236
  %vm1255 = vcmp.eq.s32.totalorder %v1186, %v1236
  %vm1256 = vcmp.eq.s32.totalorder %v1187, %v1236
  %vm1257 = vcmp.eq.s32.totalorder %v1188, %v1236
  %vm1258 = vcmp.eq.s32.totalorder %v1189, %v1236
  %vm1259 = vcmp.eq.s32.totalorder %v1190, %v1236
  %vm1260 = vcmp.eq.s32.totalorder %v1191, %v1236
  %vm1261 = vcmp.eq.s32.totalorder %v1192, %v1236
  %vm1262 = vcmp.eq.s32.totalorder %v1193, %v1236
  %vm1263 = vcmp.eq.s32.totalorder %v1194, %v1236
  %vm1264 = vcmp.eq.s32.totalorder %v1195, %v1236
  %vm1265 = vcmp.eq.s32.totalorder %v1196, %v1236
  %vm1266 = vcmp.eq.s32.totalorder %v1197, %v1236
  %vm1267 = vcmp.eq.s32.totalorder %v1198, %v1236
  %vm1268 = vcmp.eq.s32.totalorder %v1199, %v1236
  %vm1269 = vcmp.eq.s32.totalorder %v1200, %v1236
  %vm1270 = vcmp.eq.s32.totalorder %v1201, %v1236
  %vm1271 = vcmp.eq.s32.totalorder %v1202, %v1236
  %vm1272 = vcmp.eq.s32.totalorder %v1203, %v1236
  %vm1273 = vcmp.eq.s32.totalorder %v1204, %v1236
  %vm1274 = vcmp.eq.s32.totalorder %v1205, %v1236
  %vm1275 = vcmp.eq.s32.totalorder %v1206, %v1236
  %vm1276 = vcmp.eq.s32.totalorder %v1207, %v1236
  %vm1277 = vcmp.eq.s32.totalorder %v1208, %v1236
  %vm1278 = vcmp.eq.s32.totalorder %v1209, %v1236
  %vm1279 = vcmp.eq.s32.totalorder %v1210, %v1236
  %vm1280 = vcmp.eq.s32.totalorder %v1211, %v1236
  %vm1281 = vcmp.eq.s32.totalorder %v1212, %v1236
  %vm1282 = vcmp.eq.s32.totalorder %v1213, %v1236
  %vm1283 = vcmp.eq.s32.totalorder %v1214, %v1236
  %vm1284 = vcmp.eq.s32.totalorder %v1215, %v1236
  %vm1285 = vcmp.eq.s32.totalorder %v1216, %v1236
  %vm1286 = vcmp.eq.s32.totalorder %v1217, %v1236
  %vm1287 = vcmp.eq.s32.totalorder %v1218, %v1236
  %vm1288 = vcmp.eq.s32.totalorder %v1219, %v1236
  %vm1289 = vcmp.eq.s32.totalorder %v1220, %v1236
  %vm1290 = vcmp.eq.s32.totalorder %v1221, %v1236
  %vm1291 = vcmp.eq.s32.totalorder %v1222, %v1236
  %vm1292 = vcmp.eq.s32.totalorder %v1223, %v1236
  %vm1293 = vcmp.eq.s32.totalorder %v1224, %v1236
  %vm1294 = vcmp.eq.s32.totalorder %v1225, %v1236
  %vm1295 = vcmp.eq.s32.totalorder %v1226, %v1236
  %vm1296 = vcmp.eq.s32.totalorder %v1227, %v1236
  %vm1297 = vcmp.eq.s32.totalorder %v1228, %v1236
  %vm1298 = vcmp.eq.s32.totalorder %v1229, %v1236
  %vm1299 = vcmp.eq.s32.totalorder %v1230, %v1236
  %vm1300 = vcmp.eq.s32.totalorder %v1231, %v1236
  %v1301 = vsel %vm1237, 1.0, 0.0
  %v1302 = vsel %vm1238, 1.0, 0.0
  %v1303 = vsel %vm1239, 1.0, 0.0
  %v1304 = vsel %vm1240, 1.0, 0.0
  %v1305 = vsel %vm1241, 1.0, 0.0
  %v1306 = vsel %vm1242, 1.0, 0.0
  %v1307 = vsel %vm1243, 1.0, 0.0
  %v1308 = vsel %vm1244, 1.0, 0.0
  %v1309 = vsel %vm1245, 1.0, 0.0
  %v1310 = vsel %vm1246, 1.0, 0.0
  %v1311 = vsel %vm1247, 1.0, 0.0
  %v1312 = vsel %vm1248, 1.0, 0.0
  %v1313 = vsel %vm1249, 1.0, 0.0
  %v1314 = vsel %vm1250, 1.0, 0.0
  %v1315 = vsel %vm1251, 1.0, 0.0
  %v1316 = vsel %vm1252, 1.0, 0.0
  %v1317 = vsel %vm1253, 1.0, 0.0
  %v1318 = vsel %vm1254, 1.0, 0.0
  %v1319 = vsel %vm1255, 1.0, 0.0
  %v1320 = vsel %vm1256, 1.0, 0.0
  %v1321 = vsel %vm1257, 1.0, 0.0
  %v1322 = vsel %vm1258, 1.0, 0.0
  %v1323 = vsel %vm1259, 1.0, 0.0
  %v1324 = vsel %vm1260, 1.0, 0.0
  %v1325 = vsel %vm1261, 1.0, 0.0
  %v1326 = vsel %vm1262, 1.0, 0.0
  %v1327 = vsel %vm1263, 1.0, 0.0
  %v1328 = vsel %vm1264, 1.0, 0.0
  %v1329 = vsel %vm1265, 1.0, 0.0
  %v1330 = vsel %vm1266, 1.0, 0.0
  %v1331 = vsel %vm1267, 1.0, 0.0
  %v1332 = vsel %vm1268, 1.0, 0.0
  %v1333 = vsel %vm1269, 1.0, 0.0
  %v1334 = vsel %vm1270, 1.0, 0.0
  %v1335 = vsel %vm1271, 1.0, 0.0
  %v1336 = vsel %vm1272, 1.0, 0.0
  %v1337 = vsel %vm1273, 1.0, 0.0
  %v1338 = vsel %vm1274, 1.0, 0.0
  %v1339 = vsel %vm1275, 1.0, 0.0
  %v1340 = vsel %vm1276, 1.0, 0.0
  %v1341 = vsel %vm1277, 1.0, 0.0
  %v1342 = vsel %vm1278, 1.0, 0.0
  %v1343 = vsel %vm1279, 1.0, 0.0
  %v1344 = vsel %vm1280, 1.0, 0.0
  %v1345 = vsel %vm1281, 1.0, 0.0
  %v1346 = vsel %vm1282, 1.0, 0.0
  %v1347 = vsel %vm1283, 1.0, 0.0
  %v1348 = vsel %vm1284, 1.0, 0.0
  %v1349 = vsel %vm1285, 1.0, 0.0
  %v1350 = vsel %vm1286, 1.0, 0.0
  %v1351 = vsel %vm1287, 1.0, 0.0
  %v1352 = vsel %vm1288, 1.0, 0.0
  %v1353 = vsel %vm1289, 1.0, 0.0
  %v1354 = vsel %vm1290, 1.0, 0.0
  %v1355 = vsel %vm1291, 1.0, 0.0
  %v1356 = vsel %vm1292, 1.0, 0.0
  %v1357 = vsel %vm1293, 1.0, 0.0
  %v1358 = vsel %vm1294, 1.0, 0.0
  %v1359 = vsel %vm1295, 1.0, 0.0
  %v1360 = vsel %vm1296, 1.0, 0.0
  %v1361 = vsel %vm1297, 1.0, 0.0
  %v1362 = vsel %vm1298, 1.0, 0.0
  %v1363 = vsel %vm1299, 1.0, 0.0
  %v1364 = vsel %vm1300, 1.0, 0.0
  %1365 = vmatprep.subr.mxu0 0.0
  %1366 = vmatpush1.msra.mxu0 %v1316
  %1367 = vmatprep.subr.mxu0 0.0
  %1368 = vmatpush1.msra.mxu0 %v1315
  %1369 = vmatprep.subr.mxu0 0.0
  %1370 = vmatpush1.msra.mxu0 %v1314
  %1371 = vmatprep.subr.mxu0 0.0
  %1372 = vmatpush1.msra.mxu0 %v1313
  %1373 = vmatprep.subr.mxu0 0.0
  %1374 = vmatpush1.msra.mxu0 %v1312
  %1375 = vmatprep.subr.mxu0 0.0
  %1376 = vmatpush1.msra.mxu0 %v1311
  %1377 = vmatprep.subr.mxu0 0.0
  %1378 = vmatpush1.msra.mxu0 %v1310
  %1379 = vmatprep.subr.mxu0 0.0
  %1380 = vmatpush1.msra.mxu0 %v1309
  %1381 = vmatprep.subr.mxu0 0.0
  %1382 = vmatpush1.msra.mxu0 %v1308
  %1383 = vmatprep.subr.mxu0 0.0
  %1384 = vmatpush1.msra.mxu0 %v1307
  %1385 = vmatprep.subr.mxu0 0.0
  %1386 = vmatpush1.msra.mxu0 %v1306
  %1387 = vmatprep.subr.mxu0 0.0
  %1388 = vmatpush1.msra.mxu0 %v1305
  %1389 = vmatprep.subr.mxu0 0.0
  %1390 = vmatpush1.msra.mxu0 %v1304
  %1391 = vmatprep.subr.mxu0 0.0
  %1392 = vmatpush1.msra.mxu0 %v1303
  %1393 = vmatprep.subr.mxu0 0.0
  %1394 = vmatpush1.msra.mxu0 %v1302
  %1395 = vmatprep.subr.mxu0 0.0
  %1396 = vmatpush1.msra.mxu0 %v1301
  %1397 = vmatprep.subr.mxu0 0.0
  %1398 = vmatpush2.msra.mxu0 %v1332
  %1399 = vmatprep.subr.mxu0 0.0
  %1400 = vmatpush2.msra.mxu0 %v1331
  %1401 = vmatprep.subr.mxu0 0.0
  %1402 = vmatpush2.msra.mxu0 %v1330
  %1403 = vmatprep.subr.mxu0 0.0
  %1404 = vmatpush2.msra.mxu0 %v1329
  %1405 = vmatprep.subr.mxu0 0.0
  %1406 = vmatpush2.msra.mxu0 %v1328
  %1407 = vmatprep.subr.mxu0 0.0
  %1408 = vmatpush2.msra.mxu0 %v1327
  %1409 = vmatprep.subr.mxu0 0.0
  %1410 = vmatpush2.msra.mxu0 %v1326
  %1411 = vmatprep.subr.mxu0 0.0
  %1412 = vmatpush2.msra.mxu0 %v1325
  %1413 = vmatprep.subr.mxu0 0.0
  %1414 = vmatpush2.msra.mxu0 %v1324
  %1415 = vmatprep.subr.mxu0 0.0
  %1416 = vmatpush2.msra.mxu0 %v1323
  %1417 = vmatprep.subr.mxu0 0.0
  %1418 = vmatpush2.msra.mxu0 %v1322
  %1419 = vmatprep.subr.mxu0 0.0
  %1420 = vmatpush2.msra.mxu0 %v1321
  %1421 = vmatprep.subr.mxu0 0.0
  %1422 = vmatpush2.msra.mxu0 %v1320
  %1423 = vmatprep.subr.mxu0 0.0
  %1424 = vmatpush2.msra.mxu0 %v1319
  %1425 = vmatprep.subr.mxu0 0.0
  %1426 = vmatpush2.msra.mxu0 %v1318
  %1427 = vmatprep.subr.mxu0 0.0
  %1428 = vmatpush2.msra.mxu0 %v1317
  %1429 = vmatprep.mubr.f32.mxu0 %v1164
  %1430 = vmatmul.mubr.f32.gmra.mxu0 %v1163
  %v1431 = vpop.f32.mrf.mxu0
  %v1432 = vadd.f32 0.0, %v1431
  %v1433 = vpop.f32.mrf.mxu0
  %1434 = vdwg.mxu0
  %1435 = vmatprep.subr.mxu0 0.0
  %1436 = vmatpush1.msra.mxu0 %v1348
  %1437 = vmatprep.subr.mxu0 0.0
  %1438 = vmatpush1.msra.mxu0 %v1347
  %1439 = vmatprep.subr.mxu0 0.0
  %1440 = vmatpush1.msra.mxu0 %v1346
  %1441 = vmatprep.subr.mxu0 0.0
  %1442 = vmatpush1.msra.mxu0 %v1345
  %1443 = vmatprep.subr.mxu0 0.0
  %1444 = vmatpush1.msra.mxu0 %v1344
  %1445 = vmatprep.subr.mxu0 0.0
  %1446 = vmatpush1.msra.mxu0 %v1343
  %1447 = vmatprep.subr.mxu0 0.0
  %1448 = vmatpush1.msra.mxu0 %v1342
  %1449 = vmatprep.subr.mxu0 0.0
  %1450 = vmatpush1.msra.mxu0 %v1341
  %1451 = vmatprep.subr.mxu0 0.0
  %1452 = vmatpush1.msra.mxu0 %v1340
  %1453 = vmatprep.subr.mxu0 0.0
  %1454 = vmatpush1.msra.mxu0 %v1339
  %1455 = vmatprep.subr.mxu0 0.0
  %1456 = vmatpush1.msra.mxu0 %v1338
  %1457 = vmatprep.subr.mxu0 0.0
  %1458 = vmatpush1.msra.mxu0 %v1337
  %1459 = vmatprep.subr.mxu0 0.0
  %1460 = vmatpush1.msra.mxu0 %v1336
  %1461 = vmatprep.subr.mxu0 0.0
  %1462 = vmatpush1.msra.mxu0 %v1335
  %1463 = vmatprep.subr.mxu0 0.0
  %1464 = vmatpush1.msra.mxu0 %v1334
  %1465 = vmatprep.subr.mxu0 0.0
  %1466 = vmatpush1.msra.mxu0 %v1333
  %1467 = vmatprep.subr.mxu0 0.0
  %1468 = vmatpush2.msra.mxu0 %v1364
  %1469 = vmatprep.subr.mxu0 0.0
  %1470 = vmatpush2.msra.mxu0 %v1363
  %1471 = vmatprep.subr.mxu0 0.0
  %1472 = vmatpush2.msra.mxu0 %v1362
  %1473 = vmatprep.subr.mxu0 0.0
  %1474 = vmatpush2.msra.mxu0 %v1361
  %1475 = vmatprep.subr.mxu0 0.0
  %1476 = vmatpush2.msra.mxu0 %v1360
  %1477 = vmatprep.subr.mxu0 0.0
  %1478 = vmatpush2.msra.mxu0 %v1359
  %1479 = vmatprep.subr.mxu0 0.0
  %1480 = vmatpush2.msra.mxu0 %v1358
  %1481 = vmatprep.subr.mxu0 0.0
  %1482 = vmatpush2.msra.mxu0 %v1357
  %1483 = vmatprep.subr.mxu0 0.0
  %1484 = vmatpush2.msra.mxu0 %v1356
  %1485 = vmatprep.subr.mxu0 0.0
  %1486 = vmatpush2.msra.mxu0 %v1355
  %1487 = vmatprep.subr.mxu0 0.0
  %1488 = vmatpush2.msra.mxu0 %v1354
  %1489 = vmatprep.subr.mxu0 0.0
  %1490 = vmatpush2.msra.mxu0 %v1353
  %1491 = vmatprep.subr.mxu0 0.0
  %1492 = vmatpush2.msra.mxu0 %v1352
  %1493 = vmatprep.subr.mxu0 0.0
  %1494 = vmatpush2.msra.mxu0 %v1351
  %1495 = vmatprep.subr.mxu0 0.0
  %1496 = vmatpush2.msra.mxu0 %v1350
  %1497 = vmatprep.subr.mxu0 0.0
  %1498 = vmatpush2.msra.mxu0 %v1349
  %1499 = vmatprep.mubr.f32.mxu0 %v1166
  %1500 = vmatmul.mubr.f32.gmra.mxu0 %v1165
  %v1501 = vpop.f32.mrf.mxu0
  %v1502 = vadd.f32 %v1432, %v1501
  %v1503 = vpop.f32.mrf.mxu0
  %1504 = vdwg.mxu0
  %1505 = vst [vmem:[%s12] sm:$0xff] %v1502
  // Predicated region
  $region50: #{block_forward.1} parent=0 // pred_check
    _
  $region51: #{block_forward.1} parent=0 // pred_check_branch
    %1507 = sbr.rel (0) target = $region53
  $region52: #{block_forward.1} parent=0 // pred_region
    _
  $region53: #{block_forward.1} parent=0 // pred_fallthru
    _
  // Predicated region
  $region54: #{block_forward.1} parent=0 // pred_check
    _
  $region55: #{block_forward.1} parent=0 // pred_check_branch
    %1509 = sbr.rel (0) target = $region57
  $region56: #{block_forward.1} parent=0 // pred_region
    _
  $region57: #{block_forward.1} parent=0 // pred_fallthru
    _

</llo_original>
